<compile_context>
chip_gen: v5e
topology: v5e:2x2
jax: 0.10.0
libtpu: 0.0.40
codegen_flags: <defaults>
</compile_context>

<pallas_src>
from functools import partial

import jax
import jax.numpy as jnp
import numpy as np
from jax.experimental import pallas as pl
from jax.experimental.pallas import tpu as pltpu

EPS = 1e-6  # LayerNorm2d eps (NAFNet default)


# ----------------------------- kernel helpers -----------------------------
def _layernorm_ch(x):
    # x: (C, N); per-pixel layernorm over the channel (sublane) axis.
    # Affine (weight/bias) is folded into the following 1x1 conv by the wrapper.
    mu = jnp.mean(x, axis=0, keepdims=True)
    xc = x - mu
    var = jnp.mean(xc * xc, axis=0, keepdims=True)
    return xc * jax.lax.rsqrt(var + EPS)


def _conv1x1(w, x, b):
    # w: (Cout, Cin), x: (Cin, N), b: (Cout, 1) -> (Cout, N) f32.
    # Small Cin: unrolled VPU broadcast multiply-adds (avoid degenerate-K MXU).
    # Large Cin: MXU matmul with lane-dense N.
    cout, cin = w.shape
    n = x.shape[1]
    if cin <= 16:
        acc = jnp.zeros((cout, n), jnp.float32)
        for ci in range(cin):
            acc = acc + w[:, ci:ci + 1] * x[ci:ci + 1, :]
        return acc + b
    return jnp.dot(w, x, preferred_element_type=jnp.float32) + b


def _shift_lanes(x, off):
    # y[:, i] = x[:, i + off] if 0 <= i + off < N else 0  (zero-filled lane shift)
    n = x.shape[-1]
    if off == 0:
        return x
    z = jnp.zeros((x.shape[0], abs(off)), x.dtype)
    if off > 0:
        return jnp.concatenate([x[:, off:], z], axis=1)
    return jnp.concatenate([z, x[:, :n + off]], axis=1)


# --------------------------------- kernel ---------------------------------
def _nafblock_kernel(x_ref,
                     w1_ref, b1_ref,            # conv1 (LN1 affine folded)
                     wdw_ref, bdw_ref, mask_ref,  # depthwise 3x3
                     wscat_ref, bsca_ref,        # SCA 1x1 (transposed weight)
                     w3_ref, b3_ref,             # conv3 (beta folded)
                     w4_ref, b4_ref,             # conv4 (LN2 affine folded)
                     w5_ref, b5_ref,             # conv5 (gamma folded)
                     out_ref, *, W):
    x_in = x_ref[...].astype(jnp.float32)        # (C, HW), channel-major
    C, HW = x_in.shape
    DW = w1_ref.shape[0]

    # ---------- branch 1: LN -> conv1 -> dwconv3x3 -> SG -> SCA -> conv3 ----------
    n1 = _layernorm_ch(x_in)
    t = _conv1x1(w1_ref[...], n1, b1_ref[...])   # (DW, HW)

    # depthwise 3x3, padding=1: 9 lane-shifted multiply-adds with edge masks
    wdw = wdw_ref[...]                           # (DW, 9)
    masks = mask_ref[...]                        # (9, HW), 1.0 where tap is in-bounds
    acc = jnp.zeros((DW, HW), jnp.float32)
    for dy in range(3):
        for dx in range(3):
            tap = dy * 3 + dx
            off = (dy - 1) * W + (dx - 1)
            sh = _shift_lanes(t, off)
            acc = acc + (sh * masks[tap:tap + 1, :]) * wdw[:, tap:tap + 1]
    t = acc + bdw_ref[...]

    # SimpleGate
    half = t.shape[0] // 2
    t = t[:half, :] * t[half:, :]                # (C, HW)

    # SCA: global average pool -> 1x1 conv on the VPU/XLU -> fold scale into conv3
    s = jnp.mean(t, axis=1, keepdims=True)                                   # (C, 1)
    s2 = jnp.sum(wscat_ref[...] * s, axis=0, keepdims=True) + bsca_ref[...]  # (1, C)
    w3s = w3_ref[...] * s2                       # beta and SCA scale folded into w3

    y = x_in + _conv1x1(w3s, t, b3_ref[...])     # residual 1

    # ---------- branch 2 (FFN): LN -> conv4 -> SG -> conv5 ----------
    n2 = _layernorm_ch(y)
    t = _conv1x1(w4_ref[...], n2, b4_ref[...])   # (FFN, HW)
    half = t.shape[0] // 2
    t = t[:half, :] * t[half:, :]                # (C, HW)
    out = y + _conv1x1(w5_ref[...], t, b5_ref[...])

    out_ref[...] = out.astype(out_ref.dtype)


# ------------------------------ host wrapper ------------------------------
def _fold_params(p, H, W):
    """Fold LN affine / beta / gamma into the 1x1-conv weights; build dw taps & masks."""
    f32 = jnp.float32
    C = p['w3'].shape[0]
    DW = p['w1'].shape[0]
    FFN = p['w4'].shape[0]
    HW = H * W

    # LN1 affine -> conv1 ; LN2 affine -> conv4   (exact f32 folds, no matmul)
    w1f = (p['w1'] * p['ln1w'][None, :]).astype(f32)
    b1f = (p['b1'] + jnp.sum(p['w1'] * p['ln1b'][None, :], axis=1)).reshape(DW, 1).astype(f32)
    w4f = (p['w4'] * p['ln2w'][None, :]).astype(f32)
    b4f = (p['b4'] + jnp.sum(p['w4'] * p['ln2b'][None, :], axis=1)).reshape(FFN, 1).astype(f32)

    # beta -> conv3 ; gamma -> conv5
    w3f = (p['w3'] * p['beta'][:, None]).astype(f32)
    b3f = (p['b3'] * p['beta']).reshape(C, 1).astype(f32)
    w5f = (p['w5'] * p['gamma'][:, None]).astype(f32)
    b5f = (p['b5'] * p['gamma']).reshape(C, 1).astype(f32)

    # depthwise taps (DW, 9) and bias (DW, 1)
    wdw9 = p['wdw'].reshape(DW, 9).astype(f32)
    bdw = p['bdw'].reshape(DW, 1).astype(f32)

    # SCA weight transposed to (Cin, Cout) so the matvec is a VPU mul + sublane reduce
    wsca_t = jnp.transpose(p['wsca']).astype(f32)     # [ci, co] = wsca[co, ci]
    bsca_r = p['bsca'].reshape(1, C).astype(f32)

    # 9 edge-padding masks for the flattened-HW depthwise taps
    lin = np.arange(HW)
    hh, ww = lin // W, lin % W
    m = np.zeros((9, HW), np.float32)
    for dy in range(3):
        for dx in range(3):
            h2, w2 = hh + dy - 1, ww + dx - 1
            m[dy * 3 + dx] = ((h2 >= 0) & (h2 < H) & (w2 >= 0) & (w2 < W)).astype(np.float32)
    mask9 = jnp.asarray(m)

    return [w1f, b1f, wdw9, bdw, mask9, wsca_t, bsca_r, w3f, b3f, w4f, b4f, w5f, b5f]


def nafblock_pallas(x_nchw, p):
    B, C, H, W = x_nchw.shape
    HW = H * W
    kparams = _fold_params(p, H, W)
    x_flat = x_nchw.reshape(B, C, HW)            # NCHW is already channel-major: free

    def param_spec(a):
        nd = a.ndim
        return pl.BlockSpec(a.shape, lambda b, _nd=nd: (0,) * _nd)

    in_specs = ([pl.BlockSpec((None, C, HW), lambda b: (b, 0, 0))]
                + [param_spec(a) for a in kparams])
    out_spec = pl.BlockSpec((None, C, HW), lambda b: (b, 0, 0))

    out = pl.pallas_call(
        partial(_nafblock_kernel, W=W),
        out_shape=jax.ShapeDtypeStruct((B, C, HW), x_nchw.dtype),
        grid=(B,),
        in_specs=in_specs,
        out_specs=out_spec,
        compiler_params=pltpu.CompilerParams(
            dimension_semantics=("parallel",),
            vmem_limit_bytes=64 * 1024 * 1024),
    )(x_flat, *kparams)
    return out.reshape(B, C, H, W)


# ------------- pure-JAX NCHW reference (mirrors the PyTorch forward) -------------
def ref_nafblock_nchw(x, p):
    hi = jax.lax.Precision.HIGHEST

    def ln(xx, w, b):
        mu = jnp.mean(xx, axis=1, keepdims=True)
        var = jnp.mean((xx - mu) ** 2, axis=1, keepdims=True)
        y = (xx - mu) / jnp.sqrt(var + EPS)
        return y * w.reshape(1, -1, 1, 1) + b.reshape(1, -1, 1, 1)

    def conv1x1(xx, w, bias):   # w: (Cout, Cin)
        return jnp.einsum('bihw,oi->bohw', xx, w, precision=hi) + bias.reshape(1, -1, 1, 1)

    def dwconv3(xx, w, bias):   # w: (Cdw, 3, 3)
        Cdw = xx.shape[1]
        out = jax.lax.conv_general_dilated(
            xx, w[:, None, :, :], (1, 1), ((1, 1), (1, 1)),
            dimension_numbers=('NCHW', 'OIHW', 'NCHW'),
            feature_group_count=Cdw, precision=hi)
        return out + bias.reshape(1, -1, 1, 1)

    def sg(xx):
        c2 = xx.shape[1] // 2
        return xx[:, :c2] * xx[:, c2:]

    x0 = x
    t = ln(x0, p['ln1w'], p['ln1b'])
    t = conv1x1(t, p['w1'], p['b1'])
    t = dwconv3(t, p['wdw'], p['bdw'])
    t = sg(t)
    s = jnp.mean(t, axis=(2, 3), keepdims=True)
    s = jnp.einsum('bihw,oi->bohw', s, p['wsca'], precision=hi) + p['bsca'].reshape(1, -1, 1, 1)
    t = t * s
    t = conv1x1(t, p['w3'], p['b3'])
    y = x0 + t * p['beta'].reshape(1, -1, 1, 1)
    t = ln(y, p['ln2w'], p['ln2b'])
    t = conv1x1(t, p['w4'], p['b4'])
    t = sg(t)
    t = conv1x1(t, p['w5'], p['b5'])
    return y + t * p['gamma'].reshape(1, -1, 1, 1)


if __name__ == "__main__":
    B, C, H, W = 2, 4, 16, 16
    DW = 2 * C        # DW_Expand = 2
    FFN = 2 * C       # FFN_Expand = 2
    f32 = jnp.float32

    key = jax.random.PRNGKey(0)
    ks = jax.random.split(key, 20)

    def rnd(k, shape, s=0.1):
        return jax.random.normal(k, shape, dtype=f32) * s

    params = {
        # LN affines made non-trivial to exercise the folding path
        'ln1w': 1.0 + rnd(ks[0], (C,)),
        'ln1b': rnd(ks[1], (C,)),
        'w1':   rnd(ks[2], (DW, C)),
        'b1':   rnd(ks[3], (DW,)),
        'wdw':  rnd(ks[4], (DW, 3, 3)),
        'bdw':  rnd(ks[5], (DW,)),
        'wsca': rnd(ks[6], (C, C)),
        'bsca': rnd(ks[7], (C,)),
        'w3':   rnd(ks[8], (C, C)),
        'b3':   rnd(ks[9], (C,)),
        'ln2w': 1.0 + rnd(ks[10], (C,)),
        'ln2b': rnd(ks[11], (C,)),
        'w4':   rnd(ks[12], (FFN, C)),
        'b4':   rnd(ks[13], (FFN,)),
        'w5':   rnd(ks[14], (C, C)),
        'b5':   rnd(ks[15], (C,)),
        # beta/gamma are zeros in __init__; nonzero here to exercise the folds
        'beta':  rnd(ks[16], (C,)),
        'gamma': rnd(ks[17], (C,)),
    }

    x_nchw = jax.random.normal(ks[18], (B, C, H, W), dtype=f32)

    out = jax.block_until_ready(nafblock_pallas(x_nchw, params))
    ref = ref_nafblock_nchw(x_nchw, params)
    np.testing.assert_allclose(np.asarray(out), np.asarray(ref), atol=2e-4, rtol=2e-4)
    print("KERNEL_OK")
</pallas_src>

<mosaic_0001>
module attributes {stable_mosaic.version = 11 : i64} {
  func.func @_nafblock_kernel(%arg0: i32, %arg1: memref<1x4x256xf32, #tpu.memory_space<vmem>>, %arg2: memref<8x4xf32, #tpu.memory_space<vmem>>, %arg3: memref<8x1xf32, #tpu.memory_space<vmem>>, %arg4: memref<8x9xf32, #tpu.memory_space<vmem>>, %arg5: memref<8x1xf32, #tpu.memory_space<vmem>>, %arg6: memref<9x256xf32, #tpu.memory_space<vmem>>, %arg7: memref<4x4xf32, #tpu.memory_space<vmem>>, %arg8: memref<1x4xf32, #tpu.memory_space<vmem>>, %arg9: memref<4x4xf32, #tpu.memory_space<vmem>>, %arg10: memref<4x1xf32, #tpu.memory_space<vmem>>, %arg11: memref<8x4xf32, #tpu.memory_space<vmem>>, %arg12: memref<8x1xf32, #tpu.memory_space<vmem>>, %arg13: memref<4x4xf32, #tpu.memory_space<vmem>>, %arg14: memref<4x1xf32, #tpu.memory_space<vmem>>, %arg15: memref<1x4x256xf32, #tpu.memory_space<vmem>>) attributes {dimension_semantics = [#tpu.dimension_semantics<parallel>], iteration_bounds = array<i64: 2>, scalar_prefetch = 0 : i64, scratch_operands = 0 : i64, tpu.core_type = #tpu.core_type<tc>, window_params = [{transform_indices = @transform_0, window_bounds = array<i64: 1, 4, 256>}, {pipeline_mode = #tpu.pipeline_mode<synchronous>, transform_indices = @transform_1, window_bounds = array<i64: 8, 4>}, {pipeline_mode = #tpu.pipeline_mode<synchronous>, transform_indices = @transform_2, window_bounds = array<i64: 8, 1>}, {pipeline_mode = #tpu.pipeline_mode<synchronous>, transform_indices = @transform_3, window_bounds = array<i64: 8, 9>}, {pipeline_mode = #tpu.pipeline_mode<synchronous>, transform_indices = @transform_4, window_bounds = array<i64: 8, 1>}, {pipeline_mode = #tpu.pipeline_mode<synchronous>, transform_indices = @transform_5, window_bounds = array<i64: 9, 256>}, {pipeline_mode = #tpu.pipeline_mode<synchronous>, transform_indices = @transform_6, window_bounds = array<i64: 4, 4>}, {pipeline_mode = #tpu.pipeline_mode<synchronous>, transform_indices = @transform_7, window_bounds = array<i64: 1, 4>}, {pipeline_mode = #tpu.pipeline_mode<synchronous>, transform_indices = @transform_8, window_bounds = array<i64: 4, 4>}, {pipeline_mode = #tpu.pipeline_mode<synchronous>, transform_indices = @transform_9, window_bounds = array<i64: 4, 1>}, {pipeline_mode = #tpu.pipeline_mode<synchronous>, transform_indices = @transform_10, window_bounds = array<i64: 8, 4>}, {pipeline_mode = #tpu.pipeline_mode<synchronous>, transform_indices = @transform_11, window_bounds = array<i64: 8, 1>}, {pipeline_mode = #tpu.pipeline_mode<synchronous>, transform_indices = @transform_12, window_bounds = array<i64: 4, 4>}, {pipeline_mode = #tpu.pipeline_mode<synchronous>, transform_indices = @transform_13, window_bounds = array<i64: 4, 1>}, {transform_indices = @transform_14, window_bounds = array<i64: 1, 4, 256>}]} {
    %c0 = arith.constant 0 : index
    %c0_0 = arith.constant 0 : index
    %c0_1 = arith.constant 0 : index
    %0 = vector.load %arg1[%c0, %c0_0, %c0_1] : memref<1x4x256xf32, #tpu.memory_space<vmem>>, vector<1x4x256xf32>
    %1 = vector.shape_cast %0 : vector<1x4x256xf32> to vector<4x256xf32>
    %cst = arith.constant dense<0.000000e+00> : vector<256xf32>
    %2 = vector.multi_reduction <add>, %1, %cst [0] : vector<4x256xf32> to vector<256xf32>
    %3 = vector.shape_cast %2 : vector<256xf32> to vector<1x256xf32>
    %cst_2 = arith.constant 4.000000e+00 : f32
    %4 = vector.broadcast %cst_2 : f32 to vector<1x256xf32>
    %5 = arith.divf %3, %4 : vector<1x256xf32>
    %6 = vector.broadcast %5 : vector<1x256xf32> to vector<4x256xf32>
    %7 = arith.subf %1, %6 : vector<4x256xf32>
    %8 = arith.mulf %7, %7 : vector<4x256xf32>
    %cst_3 = arith.constant dense<0.000000e+00> : vector<256xf32>
    %9 = vector.multi_reduction <add>, %8, %cst_3 [0] : vector<4x256xf32> to vector<256xf32>
    %10 = vector.shape_cast %9 : vector<256xf32> to vector<1x256xf32>
    %cst_4 = arith.constant 4.000000e+00 : f32
    %11 = vector.broadcast %cst_4 : f32 to vector<1x256xf32>
    %12 = arith.divf %10, %11 : vector<1x256xf32>
    %cst_5 = arith.constant 9.99999997E-7 : f32
    %13 = vector.broadcast %cst_5 : f32 to vector<1x256xf32>
    %14 = arith.addf %12, %13 : vector<1x256xf32>
    %15 = math.rsqrt %14 : vector<1x256xf32>
    %16 = vector.broadcast %15 : vector<1x256xf32> to vector<4x256xf32>
    %17 = arith.mulf %7, %16 : vector<4x256xf32>
    %c0_6 = arith.constant 0 : index
    %c0_7 = arith.constant 0 : index
    %18 = vector.load %arg2[%c0_6, %c0_7] : memref<8x4xf32, #tpu.memory_space<vmem>>, vector<8x4xf32>
    %c0_8 = arith.constant 0 : index
    %c0_9 = arith.constant 0 : index
    %19 = vector.load %arg3[%c0_8, %c0_9] : memref<8x1xf32, #tpu.memory_space<vmem>>, vector<8x1xf32>
    %cst_10 = arith.constant 0.000000e+00 : f32
    %20 = vector.broadcast %cst_10 : f32 to vector<8x256xf32>
    %21 = vector.extract_strided_slice %18 {offsets = [0, 0], sizes = [8, 1], strides = [1, 1]} : vector<8x4xf32> to vector<8x1xf32>
    %22 = vector.extract_strided_slice %17 {offsets = [0, 0], sizes = [1, 256], strides = [1, 1]} : vector<4x256xf32> to vector<1x256xf32>
    %23 = vector.broadcast %21 : vector<8x1xf32> to vector<8x256xf32>
    %24 = vector.broadcast %22 : vector<1x256xf32> to vector<8x256xf32>
    %25 = arith.mulf %23, %24 : vector<8x256xf32>
    %26 = arith.addf %20, %25 : vector<8x256xf32>
    %27 = vector.extract_strided_slice %18 {offsets = [0, 1], sizes = [8, 1], strides = [1, 1]} : vector<8x4xf32> to vector<8x1xf32>
    %28 = vector.extract_strided_slice %17 {offsets = [1, 0], sizes = [1, 256], strides = [1, 1]} : vector<4x256xf32> to vector<1x256xf32>
    %29 = vector.broadcast %27 : vector<8x1xf32> to vector<8x256xf32>
    %30 = vector.broadcast %28 : vector<1x256xf32> to vector<8x256xf32>
    %31 = arith.mulf %29, %30 : vector<8x256xf32>
    %32 = arith.addf %26, %31 : vector<8x256xf32>
    %33 = vector.extract_strided_slice %18 {offsets = [0, 2], sizes = [8, 1], strides = [1, 1]} : vector<8x4xf32> to vector<8x1xf32>
    %34 = vector.extract_strided_slice %17 {offsets = [2, 0], sizes = [1, 256], strides = [1, 1]} : vector<4x256xf32> to vector<1x256xf32>
    %35 = vector.broadcast %33 : vector<8x1xf32> to vector<8x256xf32>
    %36 = vector.broadcast %34 : vector<1x256xf32> to vector<8x256xf32>
    %37 = arith.mulf %35, %36 : vector<8x256xf32>
    %38 = arith.addf %32, %37 : vector<8x256xf32>
    %39 = vector.extract_strided_slice %18 {offsets = [0, 3], sizes = [8, 1], strides = [1, 1]} : vector<8x4xf32> to vector<8x1xf32>
    %40 = vector.extract_strided_slice %17 {offsets = [3, 0], sizes = [1, 256], strides = [1, 1]} : vector<4x256xf32> to vector<1x256xf32>
    %41 = vector.broadcast %39 : vector<8x1xf32> to vector<8x256xf32>
    %42 = vector.broadcast %40 : vector<1x256xf32> to vector<8x256xf32>
    %43 = arith.mulf %41, %42 : vector<8x256xf32>
    %44 = arith.addf %38, %43 : vector<8x256xf32>
    %45 = vector.broadcast %19 : vector<8x1xf32> to vector<8x256xf32>
    %46 = arith.addf %44, %45 : vector<8x256xf32>
    %c0_11 = arith.constant 0 : index
    %c0_12 = arith.constant 0 : index
    %47 = vector.load %arg4[%c0_11, %c0_12] : memref<8x9xf32, #tpu.memory_space<vmem>>, vector<8x9xf32>
    %c0_13 = arith.constant 0 : index
    %c0_14 = arith.constant 0 : index
    %48 = vector.load %arg6[%c0_13, %c0_14] : memref<9x256xf32, #tpu.memory_space<vmem>>, vector<9x256xf32>
    %cst_15 = arith.constant 0.000000e+00 : f32
    %49 = vector.broadcast %cst_15 : f32 to vector<8x256xf32>
    %cst_16 = arith.constant 0.000000e+00 : f32
    %50 = vector.broadcast %cst_16 : f32 to vector<8x17xf32>
    %51 = vector.extract_strided_slice %46 {offsets = [0, 0], sizes = [8, 239], strides = [1, 1]} : vector<8x256xf32> to vector<8x239xf32>
    %52 = tpu.concatenate %50, %51 in 1 : vector<8x17xf32>, vector<8x239xf32> -> vector<8x256xf32>
    %53 = vector.extract_strided_slice %48 {offsets = [0, 0], sizes = [1, 256], strides = [1, 1]} : vector<9x256xf32> to vector<1x256xf32>
    %54 = vector.broadcast %53 : vector<1x256xf32> to vector<8x256xf32>
    %55 = arith.mulf %52, %54 : vector<8x256xf32>
    %56 = vector.extract_strided_slice %47 {offsets = [0, 0], sizes = [8, 1], strides = [1, 1]} : vector<8x9xf32> to vector<8x1xf32>
    %57 = vector.broadcast %56 : vector<8x1xf32> to vector<8x256xf32>
    %58 = arith.mulf %55, %57 : vector<8x256xf32>
    %59 = arith.addf %49, %58 : vector<8x256xf32>
    %cst_17 = arith.constant 0.000000e+00 : f32
    %60 = vector.broadcast %cst_17 : f32 to vector<8x16xf32>
    %61 = vector.extract_strided_slice %46 {offsets = [0, 0], sizes = [8, 240], strides = [1, 1]} : vector<8x256xf32> to vector<8x240xf32>
    %62 = tpu.concatenate %60, %61 in 1 : vector<8x16xf32>, vector<8x240xf32> -> vector<8x256xf32>
    %63 = vector.extract_strided_slice %48 {offsets = [1, 0], sizes = [1, 256], strides = [1, 1]} : vector<9x256xf32> to vector<1x256xf32>
    %64 = vector.broadcast %63 : vector<1x256xf32> to vector<8x256xf32>
    %65 = arith.mulf %62, %64 : vector<8x256xf32>
    %66 = vector.extract_strided_slice %47 {offsets = [0, 1], sizes = [8, 1], strides = [1, 1]} : vector<8x9xf32> to vector<8x1xf32>
    %67 = vector.broadcast %66 : vector<8x1xf32> to vector<8x256xf32>
    %68 = arith.mulf %65, %67 : vector<8x256xf32>
    %69 = arith.addf %59, %68 : vector<8x256xf32>
    %cst_18 = arith.constant 0.000000e+00 : f32
    %70 = vector.broadcast %cst_18 : f32 to vector<8x15xf32>
    %71 = vector.extract_strided_slice %46 {offsets = [0, 0], sizes = [8, 241], strides = [1, 1]} : vector<8x256xf32> to vector<8x241xf32>
    %72 = tpu.concatenate %70, %71 in 1 : vector<8x15xf32>, vector<8x241xf32> -> vector<8x256xf32>
    %73 = vector.extract_strided_slice %48 {offsets = [2, 0], sizes = [1, 256], strides = [1, 1]} : vector<9x256xf32> to vector<1x256xf32>
    %74 = vector.broadcast %73 : vector<1x256xf32> to vector<8x256xf32>
    %75 = arith.mulf %72, %74 : vector<8x256xf32>
    %76 = vector.extract_strided_slice %47 {offsets = [0, 2], sizes = [8, 1], strides = [1, 1]} : vector<8x9xf32> to vector<8x1xf32>
    %77 = vector.broadcast %76 : vector<8x1xf32> to vector<8x256xf32>
    %78 = arith.mulf %75, %77 : vector<8x256xf32>
    %79 = arith.addf %69, %78 : vector<8x256xf32>
    %cst_19 = arith.constant 0.000000e+00 : f32
    %80 = vector.broadcast %cst_19 : f32 to vector<8x1xf32>
    %81 = vector.extract_strided_slice %46 {offsets = [0, 0], sizes = [8, 255], strides = [1, 1]} : vector<8x256xf32> to vector<8x255xf32>
    %82 = tpu.concatenate %80, %81 in 1 : vector<8x1xf32>, vector<8x255xf32> -> vector<8x256xf32>
    %83 = vector.extract_strided_slice %48 {offsets = [3, 0], sizes = [1, 256], strides = [1, 1]} : vector<9x256xf32> to vector<1x256xf32>
    %84 = vector.broadcast %83 : vector<1x256xf32> to vector<8x256xf32>
    %85 = arith.mulf %82, %84 : vector<8x256xf32>
    %86 = vector.extract_strided_slice %47 {offsets = [0, 3], sizes = [8, 1], strides = [1, 1]} : vector<8x9xf32> to vector<8x1xf32>
    %87 = vector.broadcast %86 : vector<8x1xf32> to vector<8x256xf32>
    %88 = arith.mulf %85, %87 : vector<8x256xf32>
    %89 = arith.addf %79, %88 : vector<8x256xf32>
    %90 = vector.extract_strided_slice %48 {offsets = [4, 0], sizes = [1, 256], strides = [1, 1]} : vector<9x256xf32> to vector<1x256xf32>
    %91 = vector.broadcast %90 : vector<1x256xf32> to vector<8x256xf32>
    %92 = arith.mulf %46, %91 : vector<8x256xf32>
    %93 = vector.extract_strided_slice %47 {offsets = [0, 4], sizes = [8, 1], strides = [1, 1]} : vector<8x9xf32> to vector<8x1xf32>
    %94 = vector.broadcast %93 : vector<8x1xf32> to vector<8x256xf32>
    %95 = arith.mulf %92, %94 : vector<8x256xf32>
    %96 = arith.addf %89, %95 : vector<8x256xf32>
    %cst_20 = arith.constant 0.000000e+00 : f32
    %97 = vector.broadcast %cst_20 : f32 to vector<8x1xf32>
    %98 = vector.extract_strided_slice %46 {offsets = [0, 1], sizes = [8, 255], strides = [1, 1]} : vector<8x256xf32> to vector<8x255xf32>
    %99 = tpu.concatenate %98, %97 in 1 : vector<8x255xf32>, vector<8x1xf32> -> vector<8x256xf32>
    %100 = vector.extract_strided_slice %48 {offsets = [5, 0], sizes = [1, 256], strides = [1, 1]} : vector<9x256xf32> to vector<1x256xf32>
    %101 = vector.broadcast %100 : vector<1x256xf32> to vector<8x256xf32>
    %102 = arith.mulf %99, %101 : vector<8x256xf32>
    %103 = vector.extract_strided_slice %47 {offsets = [0, 5], sizes = [8, 1], strides = [1, 1]} : vector<8x9xf32> to vector<8x1xf32>
    %104 = vector.broadcast %103 : vector<8x1xf32> to vector<8x256xf32>
    %105 = arith.mulf %102, %104 : vector<8x256xf32>
    %106 = arith.addf %96, %105 : vector<8x256xf32>
    %cst_21 = arith.constant 0.000000e+00 : f32
    %107 = vector.broadcast %cst_21 : f32 to vector<8x15xf32>
    %108 = vector.extract_strided_slice %46 {offsets = [0, 15], sizes = [8, 241], strides = [1, 1]} : vector<8x256xf32> to vector<8x241xf32>
    %109 = tpu.concatenate %108, %107 in 1 : vector<8x241xf32>, vector<8x15xf32> -> vector<8x256xf32>
    %110 = vector.extract_strided_slice %48 {offsets = [6, 0], sizes = [1, 256], strides = [1, 1]} : vector<9x256xf32> to vector<1x256xf32>
    %111 = vector.broadcast %110 : vector<1x256xf32> to vector<8x256xf32>
    %112 = arith.mulf %109, %111 : vector<8x256xf32>
    %113 = vector.extract_strided_slice %47 {offsets = [0, 6], sizes = [8, 1], strides = [1, 1]} : vector<8x9xf32> to vector<8x1xf32>
    %114 = vector.broadcast %113 : vector<8x1xf32> to vector<8x256xf32>
    %115 = arith.mulf %112, %114 : vector<8x256xf32>
    %116 = arith.addf %106, %115 : vector<8x256xf32>
    %cst_22 = arith.constant 0.000000e+00 : f32
    %117 = vector.broadcast %cst_22 : f32 to vector<8x16xf32>
    %118 = vector.extract_strided_slice %46 {offsets = [0, 16], sizes = [8, 240], strides = [1, 1]} : vector<8x256xf32> to vector<8x240xf32>
    %119 = tpu.concatenate %118, %117 in 1 : vector<8x240xf32>, vector<8x16xf32> -> vector<8x256xf32>
    %120 = vector.extract_strided_slice %48 {offsets = [7, 0], sizes = [1, 256], strides = [1, 1]} : vector<9x256xf32> to vector<1x256xf32>
    %121 = vector.broadcast %120 : vector<1x256xf32> to vector<8x256xf32>
    %122 = arith.mulf %119, %121 : vector<8x256xf32>
    %123 = vector.extract_strided_slice %47 {offsets = [0, 7], sizes = [8, 1], strides = [1, 1]} : vector<8x9xf32> to vector<8x1xf32>
    %124 = vector.broadcast %123 : vector<8x1xf32> to vector<8x256xf32>
    %125 = arith.mulf %122, %124 : vector<8x256xf32>
    %126 = arith.addf %116, %125 : vector<8x256xf32>
    %cst_23 = arith.constant 0.000000e+00 : f32
    %127 = vector.broadcast %cst_23 : f32 to vector<8x17xf32>
    %128 = vector.extract_strided_slice %46 {offsets = [0, 17], sizes = [8, 239], strides = [1, 1]} : vector<8x256xf32> to vector<8x239xf32>
    %129 = tpu.concatenate %128, %127 in 1 : vector<8x239xf32>, vector<8x17xf32> -> vector<8x256xf32>
    %130 = vector.extract_strided_slice %48 {offsets = [8, 0], sizes = [1, 256], strides = [1, 1]} : vector<9x256xf32> to vector<1x256xf32>
    %131 = vector.broadcast %130 : vector<1x256xf32> to vector<8x256xf32>
    %132 = arith.mulf %129, %131 : vector<8x256xf32>
    %133 = vector.extract_strided_slice %47 {offsets = [0, 8], sizes = [8, 1], strides = [1, 1]} : vector<8x9xf32> to vector<8x1xf32>
    %134 = vector.broadcast %133 : vector<8x1xf32> to vector<8x256xf32>
    %135 = arith.mulf %132, %134 : vector<8x256xf32>
    %136 = arith.addf %126, %135 : vector<8x256xf32>
    %c0_24 = arith.constant 0 : index
    %c0_25 = arith.constant 0 : index
    %137 = vector.load %arg5[%c0_24, %c0_25] : memref<8x1xf32, #tpu.memory_space<vmem>>, vector<8x1xf32>
    %138 = vector.broadcast %137 : vector<8x1xf32> to vector<8x256xf32>
    %139 = arith.addf %136, %138 : vector<8x256xf32>
    %140 = vector.extract_strided_slice %139 {offsets = [0, 0], sizes = [4, 256], strides = [1, 1]} : vector<8x256xf32> to vector<4x256xf32>
    %141 = vector.extract_strided_slice %139 {offsets = [4, 0], sizes = [4, 256], strides = [1, 1]} : vector<8x256xf32> to vector<4x256xf32>
    %142 = arith.mulf %140, %141 : vector<4x256xf32>
    %cst_26 = arith.constant dense<0.000000e+00> : vector<4xf32>
    %143 = vector.multi_reduction <add>, %142, %cst_26 [1] : vector<4x256xf32> to vector<4xf32>
    %144 = vector.shape_cast %143 : vector<4xf32> to vector<4x1xf32>
    %cst_27 = arith.constant 2.560000e+02 : f32
    %145 = vector.broadcast %cst_27 : f32 to vector<4x1xf32>
    %146 = arith.divf %144, %145 : vector<4x1xf32>
    %c0_28 = arith.constant 0 : index
    %c0_29 = arith.constant 0 : index
    %147 = vector.load %arg7[%c0_28, %c0_29] : memref<4x4xf32, #tpu.memory_space<vmem>>, vector<4x4xf32>
    %148 = vector.broadcast %146 : vector<4x1xf32> to vector<4x4xf32>
    %149 = arith.mulf %147, %148 : vector<4x4xf32>
    %cst_30 = arith.constant dense<0.000000e+00> : vector<4xf32>
    %150 = vector.multi_reduction <add>, %149, %cst_30 [0] : vector<4x4xf32> to vector<4xf32>
    %151 = vector.shape_cast %150 : vector<4xf32> to vector<1x4xf32>
    %c0_31 = arith.constant 0 : index
    %c0_32 = arith.constant 0 : index
    %152 = vector.load %arg8[%c0_31, %c0_32] : memref<1x4xf32, #tpu.memory_space<vmem>>, vector<1x4xf32>
    %153 = arith.addf %151, %152 : vector<1x4xf32>
    %c0_33 = arith.constant 0 : index
    %c0_34 = arith.constant 0 : index
    %154 = vector.load %arg9[%c0_33, %c0_34] : memref<4x4xf32, #tpu.memory_space<vmem>>, vector<4x4xf32>
    %155 = vector.broadcast %153 : vector<1x4xf32> to vector<4x4xf32>
    %156 = arith.mulf %154, %155 : vector<4x4xf32>
    %c0_35 = arith.constant 0 : index
    %c0_36 = arith.constant 0 : index
    %157 = vector.load %arg10[%c0_35, %c0_36] : memref<4x1xf32, #tpu.memory_space<vmem>>, vector<4x1xf32>
    %cst_37 = arith.constant 0.000000e+00 : f32
    %158 = vector.broadcast %cst_37 : f32 to vector<4x256xf32>
    %159 = vector.extract_strided_slice %156 {offsets = [0, 0], sizes = [4, 1], strides = [1, 1]} : vector<4x4xf32> to vector<4x1xf32>
    %160 = vector.extract_strided_slice %142 {offsets = [0, 0], sizes = [1, 256], strides = [1, 1]} : vector<4x256xf32> to vector<1x256xf32>
    %161 = vector.broadcast %159 : vector<4x1xf32> to vector<4x256xf32>
    %162 = vector.broadcast %160 : vector<1x256xf32> to vector<4x256xf32>
    %163 = arith.mulf %161, %162 : vector<4x256xf32>
    %164 = arith.addf %158, %163 : vector<4x256xf32>
    %165 = vector.extract_strided_slice %156 {offsets = [0, 1], sizes = [4, 1], strides = [1, 1]} : vector<4x4xf32> to vector<4x1xf32>
    %166 = vector.extract_strided_slice %142 {offsets = [1, 0], sizes = [1, 256], strides = [1, 1]} : vector<4x256xf32> to vector<1x256xf32>
    %167 = vector.broadcast %165 : vector<4x1xf32> to vector<4x256xf32>
    %168 = vector.broadcast %166 : vector<1x256xf32> to vector<4x256xf32>
    %169 = arith.mulf %167, %168 : vector<4x256xf32>
    %170 = arith.addf %164, %169 : vector<4x256xf32>
    %171 = vector.extract_strided_slice %156 {offsets = [0, 2], sizes = [4, 1], strides = [1, 1]} : vector<4x4xf32> to vector<4x1xf32>
    %172 = vector.extract_strided_slice %142 {offsets = [2, 0], sizes = [1, 256], strides = [1, 1]} : vector<4x256xf32> to vector<1x256xf32>
    %173 = vector.broadcast %171 : vector<4x1xf32> to vector<4x256xf32>
    %174 = vector.broadcast %172 : vector<1x256xf32> to vector<4x256xf32>
    %175 = arith.mulf %173, %174 : vector<4x256xf32>
    %176 = arith.addf %170, %175 : vector<4x256xf32>
    %177 = vector.extract_strided_slice %156 {offsets = [0, 3], sizes = [4, 1], strides = [1, 1]} : vector<4x4xf32> to vector<4x1xf32>
    %178 = vector.extract_strided_slice %142 {offsets = [3, 0], sizes = [1, 256], strides = [1, 1]} : vector<4x256xf32> to vector<1x256xf32>
    %179 = vector.broadcast %177 : vector<4x1xf32> to vector<4x256xf32>
    %180 = vector.broadcast %178 : vector<1x256xf32> to vector<4x256xf32>
    %181 = arith.mulf %179, %180 : vector<4x256xf32>
    %182 = arith.addf %176, %181 : vector<4x256xf32>
    %183 = vector.broadcast %157 : vector<4x1xf32> to vector<4x256xf32>
    %184 = arith.addf %182, %183 : vector<4x256xf32>
    %185 = arith.addf %1, %184 : vector<4x256xf32>
    %cst_38 = arith.constant dense<0.000000e+00> : vector<256xf32>
    %186 = vector.multi_reduction <add>, %185, %cst_38 [0] : vector<4x256xf32> to vector<256xf32>
    %187 = vector.shape_cast %186 : vector<256xf32> to vector<1x256xf32>
    %cst_39 = arith.constant 4.000000e+00 : f32
    %188 = vector.broadcast %cst_39 : f32 to vector<1x256xf32>
    %189 = arith.divf %187, %188 : vector<1x256xf32>
    %190 = vector.broadcast %189 : vector<1x256xf32> to vector<4x256xf32>
    %191 = arith.subf %185, %190 : vector<4x256xf32>
    %192 = arith.mulf %191, %191 : vector<4x256xf32>
    %cst_40 = arith.constant dense<0.000000e+00> : vector<256xf32>
    %193 = vector.multi_reduction <add>, %192, %cst_40 [0] : vector<4x256xf32> to vector<256xf32>
    %194 = vector.shape_cast %193 : vector<256xf32> to vector<1x256xf32>
    %cst_41 = arith.constant 4.000000e+00 : f32
    %195 = vector.broadcast %cst_41 : f32 to vector<1x256xf32>
    %196 = arith.divf %194, %195 : vector<1x256xf32>
    %cst_42 = arith.constant 9.99999997E-7 : f32
    %197 = vector.broadcast %cst_42 : f32 to vector<1x256xf32>
    %198 = arith.addf %196, %197 : vector<1x256xf32>
    %199 = math.rsqrt %198 : vector<1x256xf32>
    %200 = vector.broadcast %199 : vector<1x256xf32> to vector<4x256xf32>
    %201 = arith.mulf %191, %200 : vector<4x256xf32>
    %c0_43 = arith.constant 0 : index
    %c0_44 = arith.constant 0 : index
    %202 = vector.load %arg11[%c0_43, %c0_44] : memref<8x4xf32, #tpu.memory_space<vmem>>, vector<8x4xf32>
    %c0_45 = arith.constant 0 : index
    %c0_46 = arith.constant 0 : index
    %203 = vector.load %arg12[%c0_45, %c0_46] : memref<8x1xf32, #tpu.memory_space<vmem>>, vector<8x1xf32>
    %cst_47 = arith.constant 0.000000e+00 : f32
    %204 = vector.broadcast %cst_47 : f32 to vector<8x256xf32>
    %205 = vector.extract_strided_slice %202 {offsets = [0, 0], sizes = [8, 1], strides = [1, 1]} : vector<8x4xf32> to vector<8x1xf32>
    %206 = vector.extract_strided_slice %201 {offsets = [0, 0], sizes = [1, 256], strides = [1, 1]} : vector<4x256xf32> to vector<1x256xf32>
    %207 = vector.broadcast %205 : vector<8x1xf32> to vector<8x256xf32>
    %208 = vector.broadcast %206 : vector<1x256xf32> to vector<8x256xf32>
    %209 = arith.mulf %207, %208 : vector<8x256xf32>
    %210 = arith.addf %204, %209 : vector<8x256xf32>
    %211 = vector.extract_strided_slice %202 {offsets = [0, 1], sizes = [8, 1], strides = [1, 1]} : vector<8x4xf32> to vector<8x1xf32>
    %212 = vector.extract_strided_slice %201 {offsets = [1, 0], sizes = [1, 256], strides = [1, 1]} : vector<4x256xf32> to vector<1x256xf32>
    %213 = vector.broadcast %211 : vector<8x1xf32> to vector<8x256xf32>
    %214 = vector.broadcast %212 : vector<1x256xf32> to vector<8x256xf32>
    %215 = arith.mulf %213, %214 : vector<8x256xf32>
    %216 = arith.addf %210, %215 : vector<8x256xf32>
    %217 = vector.extract_strided_slice %202 {offsets = [0, 2], sizes = [8, 1], strides = [1, 1]} : vector<8x4xf32> to vector<8x1xf32>
    %218 = vector.extract_strided_slice %201 {offsets = [2, 0], sizes = [1, 256], strides = [1, 1]} : vector<4x256xf32> to vector<1x256xf32>
    %219 = vector.broadcast %217 : vector<8x1xf32> to vector<8x256xf32>
    %220 = vector.broadcast %218 : vector<1x256xf32> to vector<8x256xf32>
    %221 = arith.mulf %219, %220 : vector<8x256xf32>
    %222 = arith.addf %216, %221 : vector<8x256xf32>
    %223 = vector.extract_strided_slice %202 {offsets = [0, 3], sizes = [8, 1], strides = [1, 1]} : vector<8x4xf32> to vector<8x1xf32>
    %224 = vector.extract_strided_slice %201 {offsets = [3, 0], sizes = [1, 256], strides = [1, 1]} : vector<4x256xf32> to vector<1x256xf32>
    %225 = vector.broadcast %223 : vector<8x1xf32> to vector<8x256xf32>
    %226 = vector.broadcast %224 : vector<1x256xf32> to vector<8x256xf32>
    %227 = arith.mulf %225, %226 : vector<8x256xf32>
    %228 = arith.addf %222, %227 : vector<8x256xf32>
    %229 = vector.broadcast %203 : vector<8x1xf32> to vector<8x256xf32>
    %230 = arith.addf %228, %229 : vector<8x256xf32>
    %231 = vector.extract_strided_slice %230 {offsets = [0, 0], sizes = [4, 256], strides = [1, 1]} : vector<8x256xf32> to vector<4x256xf32>
    %232 = vector.extract_strided_slice %230 {offsets = [4, 0], sizes = [4, 256], strides = [1, 1]} : vector<8x256xf32> to vector<4x256xf32>
    %233 = arith.mulf %231, %232 : vector<4x256xf32>
    %c0_48 = arith.constant 0 : index
    %c0_49 = arith.constant 0 : index
    %234 = vector.load %arg13[%c0_48, %c0_49] : memref<4x4xf32, #tpu.memory_space<vmem>>, vector<4x4xf32>
    %c0_50 = arith.constant 0 : index
    %c0_51 = arith.constant 0 : index
    %235 = vector.load %arg14[%c0_50, %c0_51] : memref<4x1xf32, #tpu.memory_space<vmem>>, vector<4x1xf32>
    %cst_52 = arith.constant 0.000000e+00 : f32
    %236 = vector.broadcast %cst_52 : f32 to vector<4x256xf32>
    %237 = vector.extract_strided_slice %234 {offsets = [0, 0], sizes = [4, 1], strides = [1, 1]} : vector<4x4xf32> to vector<4x1xf32>
    %238 = vector.extract_strided_slice %233 {offsets = [0, 0], sizes = [1, 256], strides = [1, 1]} : vector<4x256xf32> to vector<1x256xf32>
    %239 = vector.broadcast %237 : vector<4x1xf32> to vector<4x256xf32>
    %240 = vector.broadcast %238 : vector<1x256xf32> to vector<4x256xf32>
    %241 = arith.mulf %239, %240 : vector<4x256xf32>
    %242 = arith.addf %236, %241 : vector<4x256xf32>
    %243 = vector.extract_strided_slice %234 {offsets = [0, 1], sizes = [4, 1], strides = [1, 1]} : vector<4x4xf32> to vector<4x1xf32>
    %244 = vector.extract_strided_slice %233 {offsets = [1, 0], sizes = [1, 256], strides = [1, 1]} : vector<4x256xf32> to vector<1x256xf32>
    %245 = vector.broadcast %243 : vector<4x1xf32> to vector<4x256xf32>
    %246 = vector.broadcast %244 : vector<1x256xf32> to vector<4x256xf32>
    %247 = arith.mulf %245, %246 : vector<4x256xf32>
    %248 = arith.addf %242, %247 : vector<4x256xf32>
    %249 = vector.extract_strided_slice %234 {offsets = [0, 2], sizes = [4, 1], strides = [1, 1]} : vector<4x4xf32> to vector<4x1xf32>
    %250 = vector.extract_strided_slice %233 {offsets = [2, 0], sizes = [1, 256], strides = [1, 1]} : vector<4x256xf32> to vector<1x256xf32>
    %251 = vector.broadcast %249 : vector<4x1xf32> to vector<4x256xf32>
    %252 = vector.broadcast %250 : vector<1x256xf32> to vector<4x256xf32>
    %253 = arith.mulf %251, %252 : vector<4x256xf32>
    %254 = arith.addf %248, %253 : vector<4x256xf32>
    %255 = vector.extract_strided_slice %234 {offsets = [0, 3], sizes = [4, 1], strides = [1, 1]} : vector<4x4xf32> to vector<4x1xf32>
    %256 = vector.extract_strided_slice %233 {offsets = [3, 0], sizes = [1, 256], strides = [1, 1]} : vector<4x256xf32> to vector<1x256xf32>
    %257 = vector.broadcast %255 : vector<4x1xf32> to vector<4x256xf32>
    %258 = vector.broadcast %256 : vector<1x256xf32> to vector<4x256xf32>
    %259 = arith.mulf %257, %258 : vector<4x256xf32>
    %260 = arith.addf %254, %259 : vector<4x256xf32>
    %261 = vector.broadcast %235 : vector<4x1xf32> to vector<4x256xf32>
    %262 = arith.addf %260, %261 : vector<4x256xf32>
    %263 = arith.addf %185, %262 : vector<4x256xf32>
    %c0_53 = arith.constant 0 : index
    %c0_54 = arith.constant 0 : index
    %c0_55 = arith.constant 0 : index
    %264 = vector.load %arg15[%c0_53, %c0_54, %c0_55] : memref<1x4x256xf32, #tpu.memory_space<vmem>>, vector<1x4x256xf32>
    %265 = vector.shape_cast %264 : vector<1x4x256xf32> to vector<4x256xf32>
    %266 = vector.shape_cast %263 : vector<4x256xf32> to vector<1x4x256xf32>
    tpu.vector_store %arg15[%c0_53, %c0_54, %c0_55], %266 {strides = array<i32>} : memref<1x4x256xf32, #tpu.memory_space<vmem>>, vector<1x4x256xf32>,
    return
  }
  func.func @transform_0(%arg0: i32) -> (i32, i32, i32) {
    %c0_i32 = arith.constant 0 : i32
    %c0_i32_0 = arith.constant 0 : i32
    %c0_i32_1 = arith.constant 0 : i32
    return %arg0, %c0_i32, %c0_i32_0 : i32, i32, i32
  }
  func.func @transform_1(%arg0: i32) -> (i32, i32) {
    %c0_i32 = arith.constant 0 : i32
    %c0_i32_0 = arith.constant 0 : i32
    %c0_i32_1 = arith.constant 0 : i32
    return %c0_i32, %c0_i32_0 : i32, i32
  }
  func.func @transform_2(%arg0: i32) -> (i32, i32) {
    %c0_i32 = arith.constant 0 : i32
    %c0_i32_0 = arith.constant 0 : i32
    %c0_i32_1 = arith.constant 0 : i32
    return %c0_i32, %c0_i32_0 : i32, i32
  }
  func.func @transform_3(%arg0: i32) -> (i32, i32) {
    %c0_i32 = arith.constant 0 : i32
    %c0_i32_0 = arith.constant 0 : i32
    %c0_i32_1 = arith.constant 0 : i32
    return %c0_i32, %c0_i32_0 : i32, i32
  }
  func.func @transform_4(%arg0: i32) -> (i32, i32) {
    %c0_i32 = arith.constant 0 : i32
    %c0_i32_0 = arith.constant 0 : i32
    %c0_i32_1 = arith.constant 0 : i32
    return %c0_i32, %c0_i32_0 : i32, i32
  }
  func.func @transform_5(%arg0: i32) -> (i32, i32) {
    %c0_i32 = arith.constant 0 : i32
    %c0_i32_0 = arith.constant 0 : i32
    %c0_i32_1 = arith.constant 0 : i32
    return %c0_i32, %c0_i32_0 : i32, i32
  }
  func.func @transform_6(%arg0: i32) -> (i32, i32) {
    %c0_i32 = arith.constant 0 : i32
    %c0_i32_0 = arith.constant 0 : i32
    %c0_i32_1 = arith.constant 0 : i32
    return %c0_i32, %c0_i32_0 : i32, i32
  }
  func.func @transform_7(%arg0: i32) -> (i32, i32) {
    %c0_i32 = arith.constant 0 : i32
    %c0_i32_0 = arith.constant 0 : i32
    %c0_i32_1 = arith.constant 0 : i32
    return %c0_i32, %c0_i32_0 : i32, i32
  }
  func.func @transform_8(%arg0: i32) -> (i32, i32) {
    %c0_i32 = arith.constant 0 : i32
    %c0_i32_0 = arith.constant 0 : i32
    %c0_i32_1 = arith.constant 0 : i32
    return %c0_i32, %c0_i32_0 : i32, i32
  }
  func.func @transform_9(%arg0: i32) -> (i32, i32) {
    %c0_i32 = arith.constant 0 : i32
    %c0_i32_0 = arith.constant 0 : i32
    %c0_i32_1 = arith.constant 0 : i32
    return %c0_i32, %c0_i32_0 : i32, i32
  }
  func.func @transform_10(%arg0: i32) -> (i32, i32) {
    %c0_i32 = arith.constant 0 : i32
    %c0_i32_0 = arith.constant 0 : i32
    %c0_i32_1 = arith.constant 0 : i32
    return %c0_i32, %c0_i32_0 : i32, i32
  }
  func.func @transform_11(%arg0: i32) -> (i32, i32) {
    %c0_i32 = arith.constant 0 : i32
    %c0_i32_0 = arith.constant 0 : i32
    %c0_i32_1 = arith.constant 0 : i32
    return %c0_i32, %c0_i32_0 : i32, i32
  }
  func.func @transform_12(%arg0: i32) -> (i32, i32) {
    %c0_i32 = arith.constant 0 : i32
    %c0_i32_0 = arith.constant 0 : i32
    %c0_i32_1 = arith.constant 0 : i32
    return %c0_i32, %c0_i32_0 : i32, i32
  }
  func.func @transform_13(%arg0: i32) -> (i32, i32) {
    %c0_i32 = arith.constant 0 : i32
    %c0_i32_0 = arith.constant 0 : i32
    %c0_i32_1 = arith.constant 0 : i32
    return %c0_i32, %c0_i32_0 : i32, i32
  }
  func.func @transform_14(%arg0: i32) -> (i32, i32, i32) {
    %c0_i32 = arith.constant 0 : i32
    %c0_i32_0 = arith.constant 0 : i32
    %c0_i32_1 = arith.constant 0 : i32
    return %arg0, %c0_i32, %c0_i32_0 : i32, i32, i32
  }
}

</mosaic_0001>

<llo_original>
// kernel: tpu_custom_call.1
$region0: #{tpu_custom_call.1}
  #allocation0 [shape = 'u32[]', space=smem, size = 0x4, offset = 0x4, fixed_abs, tag = 'smem constant byte address 0x4 - core index']
  #allocation1 [shape = 'u32[72,128]{1,0:T(1,128)}', space=vmem, size = 0x9000, scoped, tag = 'internal scratch']
  %s0 = inlined_call_operand.vmem [shape: f32[2,4,256], index: 0, kind: input, shape index: {}]
  %s1 = inlined_call_operand.vmem [shape: f32[8,4], index: 1, kind: input, shape index: {}]
  %s2 = inlined_call_operand.vmem [shape: f32[8,1], index: 2, kind: input, shape index: {}]
  %s3 = inlined_call_operand.vmem [shape: f32[8,9], index: 3, kind: input, shape index: {}]
  %s4 = inlined_call_operand.vmem [shape: f32[8,1], index: 4, kind: input, shape index: {}]
  %s5 = inlined_call_operand.hbm [shape: f32[9,256], index: 5, kind: input, shape index: {}]
  %s6 = inlined_call_operand.vmem [shape: f32[4,4], index: 6, kind: input, shape index: {}]
  %s7 = inlined_call_operand.vmem [shape: f32[1,4], index: 7, kind: input, shape index: {}]
  %s8 = inlined_call_operand.vmem [shape: f32[4,4], index: 8, kind: input, shape index: {}]
  %s9 = inlined_call_operand.vmem [shape: f32[4,1], index: 9, kind: input, shape index: {}]
  %s10 = inlined_call_operand.vmem [shape: f32[8,4], index: 10, kind: input, shape index: {}]
  %s11 = inlined_call_operand.vmem [shape: f32[8,1], index: 11, kind: input, shape index: {}]
  %s12 = inlined_call_operand.vmem [shape: f32[4,4], index: 12, kind: input, shape index: {}]
  %s13 = inlined_call_operand.vmem [shape: f32[4,1], index: 13, kind: input, shape index: {}]
  %s14 = inlined_call_operand.hbm [shape: f32[2,4,256], index: 14, kind: output, shape index: {}]
  %s15 = sld [smem:[#allocation0]]
  $region93: #{tpu_custom_call.1} parent=0
    _
  %s17 = ssub.s32 1, %s15
  %s18 = scalar_select 0, %s17, %s15
  $region1: #{tpu_custom_call.1} parent=0
    #allocation2 [shape = 'u8[16384]{0}', space=vmem, size = 0x4000, scoped, tag = 'input window, operand 5, single buffered']
    #allocation3 [shape = 's32[2]{0}', space=sflag, size = 0x8, scoped, tag = 'scoped memory for tpu_custom_call.1']
    #allocation4 [shape = 's32[2]{0}', space=sflag, size = 0x8, scoped, tag = 'scoped memory for tpu_custom_call.1']
    #allocation5 [shape = 'u8[8192]{0}', space=vmem, size = 0x2000, scoped, tag = 'output window, operand 0']
    %19 = vsyncpa [#allocation3], 0
    %20 = vsyncpa [#allocation4], 0
    %s21 = scalar_lea.sflag [#allocation4], 1
    %22 = vsyncpa %s21, 0
    loop: start=0, step=1, limit=4
    $region2: #{tpu_custom_call.1} parent=1 // loop_pre_header
      _
    $region3: #{tpu_custom_call.1} parent=1 // loop_header
      %s24 = sphi 0, %s28
      %p25 = scmp.ge.s32.totalorder %s24, 4
      %s34 = sphi 0, %s36
      %s37 = sphi 0, %s34
      %s38 = sphi 0, %s37
      %s54 = sphi 0, %s38
      %s58 = sphi 0, %s58
      %s60 = sphi 0, %s58
      %s61 = sphi 0, %s60
      %s75 = sphi 0, %s61
      %s79 = sphi 0, %s79
      %s81 = sphi 0, %s79
      %s82 = sphi 0, %s81
      %s96 = sphi 0, %s82
      %s100 = sphi 0, %s100
      %s102 = sphi 0, %s100
      %s103 = sphi 0, %s102
      %s117 = sphi 0, %s103
      %s121 = sphi 0, %s121
      %s123 = sphi 0, %s121
      %s124 = sphi 0, %s123
      %s138 = sphi 0, %s124
      %s142 = sphi 0, %s142
      %s144 = sphi 0, %s142
      %s145 = sphi 0, %s144
      %s159 = sphi 0, %s145
      %s163 = sphi 0, %s163
      %s165 = sphi 0, %s163
      %s166 = sphi 0, %s165
      %s180 = sphi 0, %s166
      %s184 = sphi 0, %s184
      %s186 = sphi 0, %s184
      %s187 = sphi 0, %s186
      %s201 = sphi 0, %s187
      %s205 = sphi 0, %s205
      %s207 = sphi 0, %s205
      %s208 = sphi 0, %s207
      %s222 = sphi 0, %s208
      %s226 = sphi 0, %s226
      %s228 = sphi 0, %s226
      %s229 = sphi 0, %s228
      %s243 = sphi 0, %s229
      %s247 = sphi 0, %s247
      %s249 = sphi 0, %s247
      %s250 = sphi 0, %s249
      %s264 = sphi 0, %s250
      %s268 = sphi 0, %s268
      %s270 = sphi 0, %s268
      %s271 = sphi 0, %s270
      %s285 = sphi 0, %s271
      %s289 = sphi 0, %s289
      %s291 = sphi 0, %s289
      %s292 = sphi 0, %s291
      %s306 = sphi 0, %s292
      %s310 = sphi 0, %s310
      %s312 = sphi 0, %s310
      %s313 = sphi 0, %s312
      %s327 = sphi 0, %s313
      %s333 = sphi 0, %s335
      %s336 = sphi 0, %s333
      %s337 = sphi 0, %s336
      %s353 = sphi 0, %s337
    $region4: #{tpu_custom_call.1} parent=1 // loop_header_branch
      %27 = sbr.rel (%p25) target = $region8
    $region5: #{tpu_custom_call.1} parent=1 // loop_body
      %s29 = ssub.s32 %s24, 1
      %s30 = ssub.s32 %s24, 2
      %s31 = sadd.s32 %s24, 1
      %s32 = ssub.s32 %s24, %s31
      %p33 = scmp.eq.s32.totalorder %s32, 0
      %s35 = sadd.s32 %s34, 1
      %s36 = scalar_select %p33, %s34, %s35
      %p39 = pneg %p33
      %p40 = scmp.eq.s32.totalorder %s24, 1
      %p41 = por %p39, %p40
      %p42 = scmp.ne.s32.totalorder %s34, %s37
      %p43 = scmp.eq.s32.totalorder %s24, 0
      %p44 = por %p42, %p43
      %p45 = scmp.ne.s32.totalorder %s34, %s37
      %p46 = scmp.eq.s32.totalorder %s29, 1
      %p47 = por %p45, %p46
      %p48 = scmp.ne.s32.totalorder %s37, %s38
      %p49 = scmp.eq.s32.totalorder %s29, 0
      %p50 = por %p48, %p49
      %p51 = scmp.ne.s32.totalorder %s37, %s38
      %p52 = scmp.eq.s32.totalorder %s30, 1
      %p53 = por %p51, %p52
      %p55 = scmp.ne.s32.totalorder %s38, %s54
      %p56 = scmp.eq.s32.totalorder %s30, 0
      %p57 = por %p55, %p56
      %s59 = sadd.s32 %s58, 1
      %p62 = scmp.eq.s32.totalorder %s24, 1
      %p63 = scmp.ne.s32.totalorder %s58, %s60
      %p64 = scmp.eq.s32.totalorder %s24, 0
      %p65 = por %p63, %p64
      %p66 = scmp.ne.s32.totalorder %s58, %s60
      %p67 = scmp.eq.s32.totalorder %s29, 1
      %p68 = por %p66, %p67
      %p69 = scmp.ne.s32.totalorder %s60, %s61
      %p70 = scmp.eq.s32.totalorder %s29, 0
      %p71 = por %p69, %p70
      %p72 = scmp.ne.s32.totalorder %s60, %s61
      %p73 = scmp.eq.s32.totalorder %s30, 1
      %p74 = por %p72, %p73
      %p76 = scmp.ne.s32.totalorder %s61, %s75
      %p77 = scmp.eq.s32.totalorder %s30, 0
      %p78 = por %p76, %p77
      %s80 = sadd.s32 %s79, 1
      %p83 = scmp.eq.s32.totalorder %s24, 1
      %p84 = scmp.ne.s32.totalorder %s79, %s81
      %p85 = scmp.eq.s32.totalorder %s24, 0
      %p86 = por %p84, %p85
      %p87 = scmp.ne.s32.totalorder %s79, %s81
      %p88 = scmp.eq.s32.totalorder %s29, 1
      %p89 = por %p87, %p88
      %p90 = scmp.ne.s32.totalorder %s81, %s82
      %p91 = scmp.eq.s32.totalorder %s29, 0
      %p92 = por %p90, %p91
      %p93 = scmp.ne.s32.totalorder %s81, %s82
      %p94 = scmp.eq.s32.totalorder %s30, 1
      %p95 = por %p93, %p94
      %p97 = scmp.ne.s32.totalorder %s82, %s96
      %p98 = scmp.eq.s32.totalorder %s30, 0
      %p99 = por %p97, %p98
      %s101 = sadd.s32 %s100, 1
      %p104 = scmp.eq.s32.totalorder %s24, 1
      %p105 = scmp.ne.s32.totalorder %s100, %s102
      %p106 = scmp.eq.s32.totalorder %s24, 0
      %p107 = por %p105, %p106
      %p108 = scmp.ne.s32.totalorder %s100, %s102
      %p109 = scmp.eq.s32.totalorder %s29, 1
      %p110 = por %p108, %p109
      %p111 = scmp.ne.s32.totalorder %s102, %s103
      %p112 = scmp.eq.s32.totalorder %s29, 0
      %p113 = por %p111, %p112
      %p114 = scmp.ne.s32.totalorder %s102, %s103
      %p115 = scmp.eq.s32.totalorder %s30, 1
      %p116 = por %p114, %p115
      %p118 = scmp.ne.s32.totalorder %s103, %s117
      %p119 = scmp.eq.s32.totalorder %s30, 0
      %p120 = por %p118, %p119
      %s122 = sadd.s32 %s121, 1
      %p125 = scmp.eq.s32.totalorder %s24, 1
      %p126 = scmp.ne.s32.totalorder %s121, %s123
      %p127 = scmp.eq.s32.totalorder %s24, 0
      %p128 = por %p126, %p127
      %p129 = scmp.ne.s32.totalorder %s121, %s123
      %p130 = scmp.eq.s32.totalorder %s29, 1
      %p131 = por %p129, %p130
      %p132 = scmp.ne.s32.totalorder %s123, %s124
      %p133 = scmp.eq.s32.totalorder %s29, 0
      %p134 = por %p132, %p133
      %p135 = scmp.ne.s32.totalorder %s123, %s124
      %p136 = scmp.eq.s32.totalorder %s30, 1
      %p137 = por %p135, %p136
      %p139 = scmp.ne.s32.totalorder %s124, %s138
      %p140 = scmp.eq.s32.totalorder %s30, 0
      %p141 = por %p139, %p140
      %s143 = sadd.s32 %s142, 1
      %p146 = scmp.eq.s32.totalorder %s24, 1
      %p147 = scmp.ne.s32.totalorder %s142, %s144
      %p148 = scmp.eq.s32.totalorder %s24, 0
      %p149 = por %p147, %p148
      %p150 = scmp.ne.s32.totalorder %s142, %s144
      %p151 = scmp.eq.s32.totalorder %s29, 1
      %p152 = por %p150, %p151
      %p153 = scmp.ne.s32.totalorder %s144, %s145
      %p154 = scmp.eq.s32.totalorder %s29, 0
      %p155 = por %p153, %p154
      %p156 = scmp.ne.s32.totalorder %s144, %s145
      %p157 = scmp.eq.s32.totalorder %s30, 1
      %p158 = por %p156, %p157
      %p160 = scmp.ne.s32.totalorder %s145, %s159
      %p161 = scmp.eq.s32.totalorder %s30, 0
      %p162 = por %p160, %p161
      %s164 = sadd.s32 %s163, 1
      %p167 = scmp.eq.s32.totalorder %s24, 1
      %p168 = scmp.ne.s32.totalorder %s163, %s165
      %p169 = scmp.eq.s32.totalorder %s24, 0
      %p170 = por %p168, %p169
      %p171 = scmp.ne.s32.totalorder %s163, %s165
      %p172 = scmp.eq.s32.totalorder %s29, 1
      %p173 = por %p171, %p172
      %p174 = scmp.ne.s32.totalorder %s165, %s166
      %p175 = scmp.eq.s32.totalorder %s29, 0
      %p176 = por %p174, %p175
      %p177 = scmp.ne.s32.totalorder %s165, %s166
      %p178 = scmp.eq.s32.totalorder %s30, 1
      %p179 = por %p177, %p178
      %p181 = scmp.ne.s32.totalorder %s166, %s180
      %p182 = scmp.eq.s32.totalorder %s30, 0
      %p183 = por %p181, %p182
      %s185 = sadd.s32 %s184, 1
      %p188 = scmp.eq.s32.totalorder %s24, 1
      %p189 = scmp.ne.s32.totalorder %s184, %s186
      %p190 = scmp.eq.s32.totalorder %s24, 0
      %p191 = por %p189, %p190
      %p192 = scmp.ne.s32.totalorder %s184, %s186
      %p193 = scmp.eq.s32.totalorder %s29, 1
      %p194 = por %p192, %p193
      %p195 = scmp.ne.s32.totalorder %s186, %s187
      %p196 = scmp.eq.s32.totalorder %s29, 0
      %p197 = por %p195, %p196
      %p198 = scmp.ne.s32.totalorder %s186, %s187
      %p199 = scmp.eq.s32.totalorder %s30, 1
      %p200 = por %p198, %p199
      %p202 = scmp.ne.s32.totalorder %s187, %s201
      %p203 = scmp.eq.s32.totalorder %s30, 0
      %p204 = por %p202, %p203
      %s206 = sadd.s32 %s205, 1
      %p209 = scmp.eq.s32.totalorder %s24, 1
      %p210 = scmp.ne.s32.totalorder %s205, %s207
      %p211 = scmp.eq.s32.totalorder %s24, 0
      %p212 = por %p210, %p211
      %p213 = scmp.ne.s32.totalorder %s205, %s207
      %p214 = scmp.eq.s32.totalorder %s29, 1
      %p215 = por %p213, %p214
      %p216 = scmp.ne.s32.totalorder %s207, %s208
      %p217 = scmp.eq.s32.totalorder %s29, 0
      %p218 = por %p216, %p217
      %p219 = scmp.ne.s32.totalorder %s207, %s208
      %p220 = scmp.eq.s32.totalorder %s30, 1
      %p221 = por %p219, %p220
      %p223 = scmp.ne.s32.totalorder %s208, %s222
      %p224 = scmp.eq.s32.totalorder %s30, 0
      %p225 = por %p223, %p224
      %s227 = sadd.s32 %s226, 1
      %p230 = scmp.eq.s32.totalorder %s24, 1
      %p231 = scmp.ne.s32.totalorder %s226, %s228
      %p232 = scmp.eq.s32.totalorder %s24, 0
      %p233 = por %p231, %p232
      %p234 = scmp.ne.s32.totalorder %s226, %s228
      %p235 = scmp.eq.s32.totalorder %s29, 1
      %p236 = por %p234, %p235
      %p237 = scmp.ne.s32.totalorder %s228, %s229
      %p238 = scmp.eq.s32.totalorder %s29, 0
      %p239 = por %p237, %p238
      %p240 = scmp.ne.s32.totalorder %s228, %s229
      %p241 = scmp.eq.s32.totalorder %s30, 1
      %p242 = por %p240, %p241
      %p244 = scmp.ne.s32.totalorder %s229, %s243
      %p245 = scmp.eq.s32.totalorder %s30, 0
      %p246 = por %p244, %p245
      %s248 = sadd.s32 %s247, 1
      %p251 = scmp.eq.s32.totalorder %s24, 1
      %p252 = scmp.ne.s32.totalorder %s247, %s249
      %p253 = scmp.eq.s32.totalorder %s24, 0
      %p254 = por %p252, %p253
      %p255 = scmp.ne.s32.totalorder %s247, %s249
      %p256 = scmp.eq.s32.totalorder %s29, 1
      %p257 = por %p255, %p256
      %p258 = scmp.ne.s32.totalorder %s249, %s250
      %p259 = scmp.eq.s32.totalorder %s29, 0
      %p260 = por %p258, %p259
      %p261 = scmp.ne.s32.totalorder %s249, %s250
      %p262 = scmp.eq.s32.totalorder %s30, 1
      %p263 = por %p261, %p262
      %p265 = scmp.ne.s32.totalorder %s250, %s264
      %p266 = scmp.eq.s32.totalorder %s30, 0
      %p267 = por %p265, %p266
      %s269 = sadd.s32 %s268, 1
      %p272 = scmp.eq.s32.totalorder %s24, 1
      %p273 = scmp.ne.s32.totalorder %s268, %s270
      %p274 = scmp.eq.s32.totalorder %s24, 0
      %p275 = por %p273, %p274
      %p276 = scmp.ne.s32.totalorder %s268, %s270
      %p277 = scmp.eq.s32.totalorder %s29, 1
      %p278 = por %p276, %p277
      %p279 = scmp.ne.s32.totalorder %s270, %s271
      %p280 = scmp.eq.s32.totalorder %s29, 0
      %p281 = por %p279, %p280
      %p282 = scmp.ne.s32.totalorder %s270, %s271
      %p283 = scmp.eq.s32.totalorder %s30, 1
      %p284 = por %p282, %p283
      %p286 = scmp.ne.s32.totalorder %s271, %s285
      %p287 = scmp.eq.s32.totalorder %s30, 0
      %p288 = por %p286, %p287
      %s290 = sadd.s32 %s289, 1
      %p293 = scmp.eq.s32.totalorder %s24, 1
      %p294 = scmp.ne.s32.totalorder %s289, %s291
      %p295 = scmp.eq.s32.totalorder %s24, 0
      %p296 = por %p294, %p295
      %p297 = scmp.ne.s32.totalorder %s289, %s291
      %p298 = scmp.eq.s32.totalorder %s29, 1
      %p299 = por %p297, %p298
      %p300 = scmp.ne.s32.totalorder %s291, %s292
      %p301 = scmp.eq.s32.totalorder %s29, 0
      %p302 = por %p300, %p301
      %p303 = scmp.ne.s32.totalorder %s291, %s292
      %p304 = scmp.eq.s32.totalorder %s30, 1
      %p305 = por %p303, %p304
      %p307 = scmp.ne.s32.totalorder %s292, %s306
      %p308 = scmp.eq.s32.totalorder %s30, 0
      %p309 = por %p307, %p308
      %s311 = sadd.s32 %s310, 1
      %p314 = scmp.eq.s32.totalorder %s24, 1
      %p315 = scmp.ne.s32.totalorder %s310, %s312
      %p316 = scmp.eq.s32.totalorder %s24, 0
      %p317 = por %p315, %p316
      %p318 = scmp.ne.s32.totalorder %s310, %s312
      %p319 = scmp.eq.s32.totalorder %s29, 1
      %p320 = por %p318, %p319
      %p321 = scmp.ne.s32.totalorder %s312, %s313
      %p322 = scmp.eq.s32.totalorder %s29, 0
      %p323 = por %p321, %p322
      %p324 = scmp.ne.s32.totalorder %s312, %s313
      %p325 = scmp.eq.s32.totalorder %s30, 1
      %p326 = por %p324, %p325
      %p328 = scmp.ne.s32.totalorder %s313, %s327
      %p329 = scmp.eq.s32.totalorder %s30, 0
      %p330 = por %p328, %p329
      %s331 = ssub.s32 %s24, %s31
      %p332 = scmp.eq.s32.totalorder %s331, 0
      %s334 = sadd.s32 %s333, 1
      %s335 = scalar_select %p332, %s333, %s334
      %p338 = pneg %p332
      %p339 = scmp.eq.s32.totalorder %s24, 1
      %p340 = por %p338, %p339
      %p341 = scmp.ne.s32.totalorder %s333, %s336
      %p342 = scmp.eq.s32.totalorder %s24, 0
      %p343 = por %p341, %p342
      %p344 = scmp.ne.s32.totalorder %s333, %s336
      %p345 = scmp.eq.s32.totalorder %s29, 1
      %p346 = por %p344, %p345
      %p347 = scmp.ne.s32.totalorder %s336, %s337
      %p348 = scmp.eq.s32.totalorder %s29, 0
      %p349 = por %p347, %p348
      %p350 = scmp.ne.s32.totalorder %s336, %s337
      %p351 = scmp.eq.s32.totalorder %s30, 1
      %p352 = por %p350, %p351
      %p354 = scmp.ne.s32.totalorder %s337, %s353
      %p355 = scmp.eq.s32.totalorder %s30, 0
      %p356 = por %p354, %p355
      %p357 = scmp.le.s32.totalorder 1, %s24
      %p358 = scmp.lt.s32.totalorder %s24, 3
      %p359 = pnand %p357, %p358
      %p360 = pneg %p359
      // Predicated region
      $region9: #{tpu_custom_call.1} parent=5 // pred_check
        _
      $region10: #{tpu_custom_call.1} parent=5 // pred_check_branch
        %362 = sbr.rel (%p359) target = $region12
      $region11: #{tpu_custom_call.1} parent=5 // pred_region
        %s363 = ssub.s32 %s24, 1
        // Predicated region
        $region13: #{tpu_custom_call.1} parent=11 // pred_check
          %p364 = pneg %p71
        $region14: #{tpu_custom_call.1} parent=11 // pred_check_branch
          %366 = sbr.rel (%p364) target = $region16
        $region15: #{tpu_custom_call.1} parent=11 // pred_region
          _
        $region16: #{tpu_custom_call.1} parent=11 // pred_fallthru
          _
        // Predicated region
        $region17: #{tpu_custom_call.1} parent=11 // pred_check
          %p367 = pneg %p92
        $region18: #{tpu_custom_call.1} parent=11 // pred_check_branch
          %369 = sbr.rel (%p367) target = $region20
        $region19: #{tpu_custom_call.1} parent=11 // pred_region
          _
        $region20: #{tpu_custom_call.1} parent=11 // pred_fallthru
          _
        // Predicated region
        $region21: #{tpu_custom_call.1} parent=11 // pred_check
          %p370 = pneg %p113
        $region22: #{tpu_custom_call.1} parent=11 // pred_check_branch
          %372 = sbr.rel (%p370) target = $region24
        $region23: #{tpu_custom_call.1} parent=11 // pred_region
          _
        $region24: #{tpu_custom_call.1} parent=11 // pred_fallthru
          _
        // Predicated region
        $region25: #{tpu_custom_call.1} parent=11 // pred_check
          %p373 = pneg %p134
        $region26: #{tpu_custom_call.1} parent=11 // pred_check_branch
          %375 = sbr.rel (%p373) target = $region28
        $region27: #{tpu_custom_call.1} parent=11 // pred_region
          _
        $region28: #{tpu_custom_call.1} parent=11 // pred_fallthru
          _
        // Predicated region
        $region29: #{tpu_custom_call.1} parent=11 // pred_check
          %p376 = pneg %p155
        $region30: #{tpu_custom_call.1} parent=11 // pred_check_branch
          %378 = sbr.rel (%p376) target = $region32
        $region31: #{tpu_custom_call.1} parent=11 // pred_region
          %380 = vsyncadd [#allocation3], 0
          %s381 = sshll.u32 %s5, 4
          %s382 = int_to_ptr.hbm [resolvable:$true] %s381
          %s383 = sshll.u32 [#allocation2], 4
          %s384 = int_to_ptr.vmem [resolvable:$true] %s383
          %389 = dma.hbm_to_vmem [thread:$0]  %s382, 512, %s384, [#allocation3], 256, 256, 16
        $region32: #{tpu_custom_call.1} parent=11 // pred_fallthru
          _
        // Predicated region
        $region33: #{tpu_custom_call.1} parent=11 // pred_check
          %p390 = pneg %p176
        $region34: #{tpu_custom_call.1} parent=11 // pred_check_branch
          %392 = sbr.rel (%p390) target = $region36
        $region35: #{tpu_custom_call.1} parent=11 // pred_region
          _
        $region36: #{tpu_custom_call.1} parent=11 // pred_fallthru
          _
        // Predicated region
        $region37: #{tpu_custom_call.1} parent=11 // pred_check
          %p393 = pneg %p197
        $region38: #{tpu_custom_call.1} parent=11 // pred_check_branch
          %395 = sbr.rel (%p393) target = $region40
        $region39: #{tpu_custom_call.1} parent=11 // pred_region
          _
        $region40: #{tpu_custom_call.1} parent=11 // pred_fallthru
          _
        // Predicated region
        $region41: #{tpu_custom_call.1} parent=11 // pred_check
          %p396 = pneg %p218
        $region42: #{tpu_custom_call.1} parent=11 // pred_check_branch
          %398 = sbr.rel (%p396) target = $region44
        $region43: #{tpu_custom_call.1} parent=11 // pred_region
          _
        $region44: #{tpu_custom_call.1} parent=11 // pred_fallthru
          _
        // Predicated region
        $region45: #{tpu_custom_call.1} parent=11 // pred_check
          %p399 = pneg %p239
        $region46: #{tpu_custom_call.1} parent=11 // pred_check_branch
          %401 = sbr.rel (%p399) target = $region48
        $region47: #{tpu_custom_call.1} parent=11 // pred_region
          _
        $region48: #{tpu_custom_call.1} parent=11 // pred_fallthru
          _
        // Predicated region
        $region49: #{tpu_custom_call.1} parent=11 // pred_check
          %p402 = pneg %p260
        $region50: #{tpu_custom_call.1} parent=11 // pred_check_branch
          %404 = sbr.rel (%p402) target = $region52
        $region51: #{tpu_custom_call.1} parent=11 // pred_region
          _
        $region52: #{tpu_custom_call.1} parent=11 // pred_fallthru
          _
        // Predicated region
        $region53: #{tpu_custom_call.1} parent=11 // pred_check
          %p405 = pneg %p281
        $region54: #{tpu_custom_call.1} parent=11 // pred_check_branch
          %407 = sbr.rel (%p405) target = $region56
        $region55: #{tpu_custom_call.1} parent=11 // pred_region
          _
        $region56: #{tpu_custom_call.1} parent=11 // pred_fallthru
          _
        // Predicated region
        $region57: #{tpu_custom_call.1} parent=11 // pred_check
          %p408 = pneg %p302
        $region58: #{tpu_custom_call.1} parent=11 // pred_check_branch
          %410 = sbr.rel (%p408) target = $region60
        $region59: #{tpu_custom_call.1} parent=11 // pred_region
          _
        $region60: #{tpu_custom_call.1} parent=11 // pred_fallthru
          _
        // Predicated region
        $region61: #{tpu_custom_call.1} parent=11 // pred_check
          %p411 = pneg %p323
        $region62: #{tpu_custom_call.1} parent=11 // pred_check_branch
          %413 = sbr.rel (%p411) target = $region64
        $region63: #{tpu_custom_call.1} parent=11 // pred_region
          _
        $region64: #{tpu_custom_call.1} parent=11 // pred_fallthru
          _
      $region12: #{tpu_custom_call.1} parent=5 // pred_fallthru
        _
      %p414 = scmp.lt.s32.totalorder %s24, 2
      // Predicated region
      $region65: #{tpu_custom_call.1} parent=5 // pred_check
        %p415 = pneg %p414
      $region66: #{tpu_custom_call.1} parent=5 // pred_check_branch
        %417 = sbr.rel (%p415) target = $region68
      $region67: #{tpu_custom_call.1} parent=5 // pred_region
        // Predicated region
        $region69: #{tpu_custom_call.1} parent=67 // pred_check
          %p418 = pneg %p44
        $region70: #{tpu_custom_call.1} parent=67 // pred_check_branch
          %420 = sbr.rel (%p418) target = $region72
        $region71: #{tpu_custom_call.1} parent=67 // pred_region
          %p421 = scmp.lt.s32.totalorder %s24, 1
          %s422 = scalar_select %p421, %s24, 1
          %s423 = smul.addr %s422, 2
          %s424 = smul.addr %s423, 4
          %s425 = scalar_lea.vmem %s0, %s424
        $region72: #{tpu_custom_call.1} parent=67 // pred_fallthru
          _
      $region68: #{tpu_custom_call.1} parent=5 // pred_fallthru
        _
      %p426 = scmp.le.s32.totalorder 1, %s24
      %p427 = scmp.lt.s32.totalorder %s24, 3
      %p428 = pnand %p426, %p427
      %p429 = pneg %p428
      // Predicated region
      $region73: #{tpu_custom_call.1} parent=5 // pred_check
        _
      $region74: #{tpu_custom_call.1} parent=5 // pred_check_branch
        %431 = sbr.rel (%p428) target = $region76
      $region75: #{tpu_custom_call.1} parent=5 // pred_region
        %s432 = ssub.s32 %s24, 1
        // Predicated region
        $region77: #{tpu_custom_call.1} parent=75 // pred_check
          %p433 = pneg %p155
        $region78: #{tpu_custom_call.1} parent=75 // pred_check_branch
          %435 = sbr.rel (%p433) target = $region80
        $region79: #{tpu_custom_call.1} parent=75 // pred_region
          %437 = dma.done [#allocation3], 512
        $region80: #{tpu_custom_call.1} parent=75 // pred_fallthru
          _
        %p438 = scmp.lt.s32.totalorder %s29, 1
        %s439 = scalar_select %p438, %s29, 1
        %s440 = smul.addr %s439, 2
        %s441 = smul.addr %s440, 4
        %s442 = scalar_lea.vmem %s0, %s441
        %p443 = pneg %p50
        %p444 = pneg %p47
        %p445 = pneg %p71
        %p446 = pneg %p68
        %p447 = pneg %p92
        %p448 = pneg %p89
        %p449 = pneg %p113
        %p450 = pneg %p110
        %p451 = pneg %p134
        %p452 = pneg %p131
        %p453 = pneg %p155
        %p454 = pneg %p152
        %p455 = pneg %p176
        %p456 = pneg %p173
        %p457 = pneg %p197
        %p458 = pneg %p194
        %p459 = pneg %p218
        %p460 = pneg %p215
        %p461 = pneg %p239
        %p462 = pneg %p236
        %p463 = pneg %p260
        %p464 = pneg %p257
        %p465 = pneg %p281
        %p466 = pneg %p278
        %p467 = pneg %p302
        %p468 = pneg %p299
        %p469 = pneg %p323
        %p470 = pneg %p320
        %p471 = pneg %p349
        %p472 = pneg %p346
        %s473 = sand.u32 %s336, 1
        %s474 = scalar_lea.sflag [#allocation4], %s473
        %s475 = sand.u32 %s336, 1
        %s476 = smul.addr %s475, 8
        %s477 = scalar_lea.vmem [#allocation5], %s476
        %p478 = scmp.lt.s32.totalorder %s29, 1
        %s479 = scalar_select %p478, %s29, 1
        %s480 = smul.addr %s479, 2
        %s481 = smul.addr %s480, 4
        %s482 = scalar_lea.vmem %s0, %s481
        %v483 = vld [vmem:[%s482] sm:$0xff]
        %485 = vst [vmem:[#allocation1] ss:$2 sm:$0xff] %v483
        %v486 = vld.sshfl [vmem:[#allocation1] sm:$0xff pattern:$0x75316420]
        %v487 = vld.sshfl [vmem:[#allocation1 + $0x8] sm:$0xff pattern:$0x75316420]
        %vm490 = vcmask 1043456
        %v491 = vsel %vm490, %v486, 0.0
        %v492 = vrot.slane %v491, 4
        %v493 = vadd.f32 %v491, %v492
        %v494 = vrot.slane %v493, 2
        %v495 = vadd.f32 %v493, %v494
        %v496 = vrot.slane %v495, 1
        %v497 = vadd.f32 %v495, %v496
        %v498 = vsel %vm490, %v487, 0.0
        %v499 = vrot.slane %v498, 4
        %v500 = vadd.f32 %v498, %v499
        %v501 = vrot.slane %v500, 2
        %v502 = vadd.f32 %v500, %v501
        %v503 = vrot.slane %v502, 1
        %v504 = vadd.f32 %v502, %v503
        %v505 = vrcp.pop 4.0
        %v506 = vmul.f32 4.0, %v505
        %v507 = vsub.f32 1.0, %v506
        %v508 = vmul.f32 %v505, %v507
        %v509 = vadd.f32 %v505, %v508
        %vm510 = vweird.f32 %v505
        %v511 = vsel %vm510, %v505, %v509
        %v512 = vmul.f32 %v497, %v511
        %v513 = vmul.f32 %v504, %v511
        %v516 = vrot.slane %v513, 4
        %v517 = vsel %vm490, %v512, %v516
        %v519 = vsub.f32 %v483, %v517
        %v520 = vmul.f32 %v519, %v519
        %522 = vst [vmem:[#allocation1] ss:$2 sm:$0xff] %v520
        %v523 = vld.sshfl [vmem:[#allocation1] sm:$0xff pattern:$0x75316420]
        %v524 = vld.sshfl [vmem:[#allocation1 + $0x8] sm:$0xff pattern:$0x75316420]
        %v527 = vsel %vm490, %v523, 0.0
        %v528 = vrot.slane %v527, 4
        %v529 = vadd.f32 %v527, %v528
        %v530 = vrot.slane %v529, 2
        %v531 = vadd.f32 %v529, %v530
        %v532 = vrot.slane %v531, 1
        %v533 = vadd.f32 %v531, %v532
        %v534 = vsel %vm490, %v524, 0.0
        %v535 = vrot.slane %v534, 4
        %v536 = vadd.f32 %v534, %v535
        %v537 = vrot.slane %v536, 2
        %v538 = vadd.f32 %v536, %v537
        %v539 = vrot.slane %v538, 1
        %v540 = vadd.f32 %v538, %v539
        %v541 = vmul.f32 %v533, %v511
        %v542 = vmul.f32 %v540, %v511
        %v543 = vadd.f32 %v541, 1e-06
        %v544 = vadd.f32 %v542, 1e-06
        %v545 = vrsqrt.pop %v543
        %v546 = vmul.f32 %v545, %v543
        %v547 = vmul.f32 %v546, %v545
        %v548 = vmul.f32 0.5, %v547
        %v549 = vsub.f32 1.5, %v548
        %v550 = vmul.f32 %v545, %v549
        %vm551 = vweird.f32 %v543
        %vm552 = vweird.f32 %v545
        %vm553 = vmor %vm551, %vm552
        %v554 = vsel %vm553, %v545, %v550
        %v555 = vrsqrt.pop %v544
        %v556 = vmul.f32 %v555, %v544
        %v557 = vmul.f32 %v556, %v555
        %v558 = vmul.f32 0.5, %v557
        %v559 = vsub.f32 1.5, %v558
        %v560 = vmul.f32 %v555, %v559
        %vm561 = vweird.f32 %v544
        %vm562 = vweird.f32 %v555
        %vm563 = vmor %vm561, %vm562
        %v564 = vsel %vm563, %v555, %v560
        %v567 = vrot.slane %v564, 4
        %v568 = vsel %vm490, %v554, %v567
        %v570 = vmul.f32 %v519, %v568
        %v571 = vld [vmem:[%s1] sm:$0xff]
        %v572 = vld [vmem:[%s2] sm:$0xff]
        %574 = vset.pattern.permute.xlu0 0
        %575 = vperm.xlu0 %574, %v571
        %v576 = vpop.permute.xlu0 %575
        %v579 = vperm.slane %v570, 0
        %v580 = vperm.slane %v570, 4
        %v583 = vperm.slane %v579, 0
        %v584 = vperm.slane %v580, 0
        %v585 = vmul.f32 %v576, %v583
        %v586 = vmul.f32 %v576, %v584
        %v587 = vadd.f32 %v585, 0.0
        %v588 = vadd.f32 %v586, 0.0
        %589 = vset.pattern.permute.xlu0 1
        %590 = vperm.xlu0 %589, %v571
        %v591 = vpop.permute.xlu0 %590
        %v593 = vperm.slane %v570, 1
        %v594 = vperm.slane %v570, 5
        %v597 = vperm.slane %v593, 1
        %v598 = vperm.slane %v594, 1
        %v599 = vmul.f32 %v591, %v597
        %v600 = vmul.f32 %v591, %v598
        %v601 = vadd.f32 %v587, %v599
        %v602 = vadd.f32 %v588, %v600
        %603 = vset.pattern.permute.xlu0 2
        %604 = vperm.xlu0 %603, %v571
        %v605 = vpop.permute.xlu0 %604
        %v607 = vperm.slane %v570, 2
        %v608 = vperm.slane %v570, 6
        %v611 = vperm.slane %v607, 2
        %v612 = vperm.slane %v608, 2
        %v613 = vmul.f32 %v605, %v611
        %v614 = vmul.f32 %v605, %v612
        %v615 = vadd.f32 %v601, %v613
        %v616 = vadd.f32 %v602, %v614
        %617 = vset.pattern.permute.xlu0 3
        %618 = vperm.xlu0 %617, %v571
        %v619 = vpop.permute.xlu0 %618
        %v621 = vperm.slane %v570, 3
        %v622 = vperm.slane %v570, 7
        %v625 = vperm.slane %v621, 3
        %v626 = vperm.slane %v622, 3
        %v627 = vmul.f32 %v619, %v625
        %v628 = vmul.f32 %v619, %v626
        %v629 = vadd.f32 %v615, %v627
        %v630 = vadd.f32 %v616, %v628
        %632 = vset.pattern.permute.xlu0 0
        %633 = vperm.xlu0 %632, %v572
        %v634 = vpop.permute.xlu0 %633
        %v636 = vadd.f32 %v629, %v634
        %v637 = vadd.f32 %v630, %v634
        %v638 = vld [vmem:[%s3] sm:$0xff]
        %v639 = vld [vmem:[#allocation2] sm:$0xff]
        %v640 = vld [vmem:[#allocation2 + $0x8] sm:$0xff]
        %v641 = vld [vmem:[#allocation2 + $0x10] sm:$0x1]
        %v642 = vld [vmem:[#allocation2 + $0x18] sm:$0x1]
        %645 = vrot.lane.b32.xlu0 %v636, 17
        %v646 = vpop.permute.xlu0 %645
        %647 = vrot.lane.b32.xlu0 %v637, 17
        %v648 = vpop.permute.xlu0 %647
        %vm649 = vcmask 138240
        %v650 = vsel %vm649, %v646, %v648
        %v653 = vsel %vm649, 0.0, %v646
        %v654 = vperm.slane %v639, 0
        %v655 = vperm.slane %v640, 0
        %v656 = vmul.f32 %v653, %v654
        %v657 = vmul.f32 %v650, %v655
        %659 = vset.pattern.permute.xlu0 0
        %660 = vperm.xlu0 %659, %v638
        %v661 = vpop.permute.xlu0 %660
        %v663 = vmul.f32 %v656, %v661
        %v664 = vmul.f32 %v657, %v661
        %v665 = vadd.f32 %v663, 0.0
        %v666 = vadd.f32 %v664, 0.0
        %667 = vrot.lane.b32.xlu0 %v636, 16
        %v668 = vpop.permute.xlu0 %667
        %669 = vrot.lane.b32.xlu0 %v637, 16
        %v670 = vpop.permute.xlu0 %669
        %vm671 = vcmask 130048
        %v672 = vsel %vm671, %v668, %v670
        %v675 = vsel %vm671, 0.0, %v668
        %v676 = vperm.slane %v639, 1
        %v677 = vperm.slane %v640, 1
        %v678 = vmul.f32 %v675, %v676
        %v679 = vmul.f32 %v672, %v677
        %680 = vset.pattern.permute.xlu0 1
        %681 = vperm.xlu0 %680, %v638
        %v682 = vpop.permute.xlu0 %681
        %v684 = vmul.f32 %v678, %v682
        %v685 = vmul.f32 %v679, %v682
        %v686 = vadd.f32 %v665, %v684
        %v687 = vadd.f32 %v666, %v685
        %688 = vrot.lane.b32.xlu0 %v636, 15
        %v689 = vpop.permute.xlu0 %688
        %690 = vrot.lane.b32.xlu0 %v637, 15
        %v691 = vpop.permute.xlu0 %690
        %vm692 = vcmask 121856
        %v693 = vsel %vm692, %v689, %v691
        %v696 = vsel %vm692, 0.0, %v689
        %v697 = vperm.slane %v639, 2
        %v698 = vperm.slane %v640, 2
        %v699 = vmul.f32 %v696, %v697
        %v700 = vmul.f32 %v693, %v698
        %701 = vset.pattern.permute.xlu0 2
        %702 = vperm.xlu0 %701, %v638
        %v703 = vpop.permute.xlu0 %702
        %v705 = vmul.f32 %v699, %v703
        %v706 = vmul.f32 %v700, %v703
        %v707 = vadd.f32 %v686, %v705
        %v708 = vadd.f32 %v687, %v706
        %709 = vrot.lane.b32.xlu0 %v636, 1
        %v710 = vpop.permute.xlu0 %709
        %711 = vrot.lane.b32.xlu0 %v637, 1
        %v712 = vpop.permute.xlu0 %711
        %vm713 = vcmask 7168
        %v714 = vsel %vm713, %v710, %v712
        %v717 = vsel %vm713, 0.0, %v710
        %v718 = vperm.slane %v639, 3
        %v719 = vperm.slane %v640, 3
        %v720 = vmul.f32 %v717, %v718
        %v721 = vmul.f32 %v714, %v719
        %722 = vset.pattern.permute.xlu0 3
        %723 = vperm.xlu0 %722, %v638
        %v724 = vpop.permute.xlu0 %723
        %v726 = vmul.f32 %v720, %v724
        %v727 = vmul.f32 %v721, %v724
        %v728 = vadd.f32 %v707, %v726
        %v729 = vadd.f32 %v708, %v727
        %v730 = vperm.slane %v639, 4
        %v731 = vperm.slane %v640, 4
        %v732 = vmul.f32 %v636, %v730
        %v733 = vmul.f32 %v637, %v731
        %734 = vset.pattern.permute.xlu0 4
        %735 = vperm.xlu0 %734, %v638
        %v736 = vpop.permute.xlu0 %735
        %v738 = vmul.f32 %v732, %v736
        %v739 = vmul.f32 %v733, %v736
        %v740 = vadd.f32 %v728, %v738
        %v741 = vadd.f32 %v729, %v739
        %742 = vrot.lane.b32.xlu0 %v636, 127
        %v743 = vpop.permute.xlu0 %742
        %744 = vrot.lane.b32.xlu0 %v637, 127
        %v745 = vpop.permute.xlu0 %744
        %vm746 = vcmask 1039360
        %v747 = vsel %vm746, %v743, %v745
        %v750 = vsel %vm746, %v745, 0.0
        %v751 = vperm.slane %v639, 5
        %v752 = vperm.slane %v640, 5
        %v753 = vmul.f32 %v747, %v751
        %v754 = vmul.f32 %v750, %v752
        %755 = vset.pattern.permute.xlu0 5
        %756 = vperm.xlu0 %755, %v638
        %v757 = vpop.permute.xlu0 %756
        %v759 = vmul.f32 %v753, %v757
        %v760 = vmul.f32 %v754, %v757
        %v761 = vadd.f32 %v740, %v759
        %v762 = vadd.f32 %v741, %v760
        %763 = vrot.lane.b32.xlu0 %v636, 113
        %v764 = vpop.permute.xlu0 %763
        %765 = vrot.lane.b32.xlu0 %v637, 113
        %v766 = vpop.permute.xlu0 %765
        %vm767 = vcmask 924672
        %v768 = vsel %vm767, %v764, %v766
        %v771 = vsel %vm767, %v766, 0.0
        %v772 = vperm.slane %v639, 6
        %v773 = vperm.slane %v640, 6
        %v774 = vmul.f32 %v768, %v772
        %v775 = vmul.f32 %v771, %v773
        %776 = vset.pattern.permute.xlu0 6
        %777 = vperm.xlu0 %776, %v638
        %v778 = vpop.permute.xlu0 %777
        %v780 = vmul.f32 %v774, %v778
        %v781 = vmul.f32 %v775, %v778
        %v782 = vadd.f32 %v761, %v780
        %v783 = vadd.f32 %v762, %v781
        %784 = vrot.lane.b32.xlu0 %v636, 112
        %v785 = vpop.permute.xlu0 %784
        %786 = vrot.lane.b32.xlu0 %v637, 112
        %v787 = vpop.permute.xlu0 %786
        %vm788 = vcmask 916480
        %v789 = vsel %vm788, %v785, %v787
        %v792 = vsel %vm788, %v787, 0.0
        %v793 = vperm.slane %v639, 7
        %v794 = vperm.slane %v640, 7
        %v795 = vmul.f32 %v789, %v793
        %v796 = vmul.f32 %v792, %v794
        %797 = vset.pattern.permute.xlu0 7
        %798 = vperm.xlu0 %797, %v638
        %v799 = vpop.permute.xlu0 %798
        %v801 = vmul.f32 %v795, %v799
        %v802 = vmul.f32 %v796, %v799
        %v803 = vadd.f32 %v782, %v801
        %v804 = vadd.f32 %v783, %v802
        %805 = vrot.lane.b32.xlu0 %v636, 111
        %v806 = vpop.permute.xlu0 %805
        %807 = vrot.lane.b32.xlu0 %v637, 111
        %v808 = vpop.permute.xlu0 %807
        %vm809 = vcmask 908288
        %v810 = vsel %vm809, %v806, %v808
        %v813 = vsel %vm809, %v808, 0.0
        %v814 = vperm.slane %v641, 0
        %v815 = vperm.slane %v642, 0
        %v816 = vmul.f32 %v810, %v814
        %v817 = vmul.f32 %v813, %v815
        %818 = vset.pattern.permute.xlu0 8
        %819 = vperm.xlu0 %818, %v638
        %v820 = vpop.permute.xlu0 %819
        %v822 = vmul.f32 %v816, %v820
        %v823 = vmul.f32 %v817, %v820
        %v824 = vadd.f32 %v803, %v822
        %v825 = vadd.f32 %v804, %v823
        %v826 = vld [vmem:[%s4] sm:$0xff]
        %828 = vset.pattern.permute.xlu0 0
        %829 = vperm.xlu0 %828, %v826
        %v830 = vpop.permute.xlu0 %829
        %v832 = vadd.f32 %v824, %v830
        %v833 = vadd.f32 %v825, %v830
        %v836 = vrot.slane %v832, 4
        %v837 = vrot.slane %v833, 4
        %v840 = vmul.f32 %v832, %v836
        %v841 = vmul.f32 %v833, %v837
        %v842 = vsel %vm490, %v840, 0.0
        %v843 = vsel %vm490, %v841, 0.0
        %v844 = vadd.f32 %v842, %v843
        %845 = vadd.xlane.f32.xlu0 %v844
        %v846 = vpop.xlane.xlu0 %845
        %v847 = vrcp.pop 256.0
        %v848 = vmul.f32 256.0, %v847
        %v849 = vsub.f32 1.0, %v848
        %v850 = vmul.f32 %v847, %v849
        %v851 = vadd.f32 %v847, %v850
        %vm852 = vweird.f32 %v847
        %v853 = vsel %vm852, %v847, %v851
        %v854 = vmul.f32 %v846, %v853
        %v855 = vld [vmem:[%s6] sm:$0xf]
        %v856 = vmul.f32 %v855, %v854
        %vm857 = vcmask 27648
        %v858 = vsel %vm857, %v856, 0.0
        %v859 = vrot.slane %v858, 4
        %v860 = vadd.f32 %v858, %v859
        %v861 = vrot.slane %v860, 2
        %v862 = vadd.f32 %v860, %v861
        %v863 = vrot.slane %v862, 1
        %v864 = vadd.f32 %v862, %v863
        %v865 = vld [vmem:[%s7] sm:$0x1]
        %v866 = vadd.f32 %v864, %v865
        %v867 = vld [vmem:[%s8] sm:$0xf]
        %v868 = vperm.slane %v866, 0
        %v869 = vmul.f32 %v867, %v868
        %v870 = vld [vmem:[%s9] sm:$0xf]
        %872 = vset.pattern.permute.xlu0 0
        %873 = vperm.xlu0 %872, %v869
        %v874 = vpop.permute.xlu0 %873
        %v876 = vperm.slane %v840, 0
        %v877 = vperm.slane %v841, 0
        %v878 = vmul.f32 %v874, %v876
        %v879 = vmul.f32 %v874, %v877
        %v880 = vadd.f32 %v878, 0.0
        %v881 = vadd.f32 %v879, 0.0
        %882 = vset.pattern.permute.xlu0 1
        %883 = vperm.xlu0 %882, %v869
        %v884 = vpop.permute.xlu0 %883
        %v886 = vperm.slane %v840, 1
        %v887 = vperm.slane %v841, 1
        %v888 = vmul.f32 %v884, %v886
        %v889 = vmul.f32 %v884, %v887
        %v890 = vadd.f32 %v880, %v888
        %v891 = vadd.f32 %v881, %v889
        %892 = vset.pattern.permute.xlu0 2
        %893 = vperm.xlu0 %892, %v869
        %v894 = vpop.permute.xlu0 %893
        %v896 = vperm.slane %v840, 2
        %v897 = vperm.slane %v841, 2
        %v898 = vmul.f32 %v894, %v896
        %v899 = vmul.f32 %v894, %v897
        %v900 = vadd.f32 %v890, %v898
        %v901 = vadd.f32 %v891, %v899
        %902 = vset.pattern.permute.xlu0 3
        %903 = vperm.xlu0 %902, %v869
        %v904 = vpop.permute.xlu0 %903
        %v906 = vperm.slane %v840, 3
        %v907 = vperm.slane %v841, 3
        %v908 = vmul.f32 %v904, %v906
        %v909 = vmul.f32 %v904, %v907
        %v910 = vadd.f32 %v900, %v908
        %v911 = vadd.f32 %v901, %v909
        %913 = vset.pattern.permute.xlu0 0
        %914 = vperm.xlu0 %913, %v870
        %v915 = vpop.permute.xlu0 %914
        %v917 = vadd.f32 %v910, %v915
        %v918 = vadd.f32 %v911, %v915
        %v921 = vrot.slane %v918, 4
        %v922 = vsel %vm490, %v917, %v921
        %v924 = vadd.f32 %v483, %v922
        %926 = vst [vmem:[#allocation1] ss:$2 sm:$0xff] %v924
        %v927 = vld.sshfl [vmem:[#allocation1] sm:$0xff pattern:$0x75316420]
        %v928 = vld.sshfl [vmem:[#allocation1 + $0x8] sm:$0xff pattern:$0x75316420]
        %v931 = vsel %vm490, %v927, 0.0
        %v932 = vrot.slane %v931, 4
        %v933 = vadd.f32 %v931, %v932
        %v934 = vrot.slane %v933, 2
        %v935 = vadd.f32 %v933, %v934
        %v936 = vrot.slane %v935, 1
        %v937 = vadd.f32 %v935, %v936
        %v938 = vsel %vm490, %v928, 0.0
        %v939 = vrot.slane %v938, 4
        %v940 = vadd.f32 %v938, %v939
        %v941 = vrot.slane %v940, 2
        %v942 = vadd.f32 %v940, %v941
        %v943 = vrot.slane %v942, 1
        %v944 = vadd.f32 %v942, %v943
        %v945 = vmul.f32 %v937, %v511
        %v946 = vmul.f32 %v944, %v511
        %v949 = vrot.slane %v946, 4
        %v950 = vsel %vm490, %v945, %v949
        %v952 = vsub.f32 %v924, %v950
        %v953 = vmul.f32 %v952, %v952
        %955 = vst [vmem:[#allocation1] ss:$2 sm:$0xff] %v953
        %v956 = vld.sshfl [vmem:[#allocation1] sm:$0xff pattern:$0x75316420]
        %v957 = vld.sshfl [vmem:[#allocation1 + $0x8] sm:$0xff pattern:$0x75316420]
        %v960 = vsel %vm490, %v956, 0.0
        %v961 = vrot.slane %v960, 4
        %v962 = vadd.f32 %v960, %v961
        %v963 = vrot.slane %v962, 2
        %v964 = vadd.f32 %v962, %v963
        %v965 = vrot.slane %v964, 1
        %v966 = vadd.f32 %v964, %v965
        %v967 = vsel %vm490, %v957, 0.0
        %v968 = vrot.slane %v967, 4
        %v969 = vadd.f32 %v967, %v968
        %v970 = vrot.slane %v969, 2
        %v971 = vadd.f32 %v969, %v970
        %v972 = vrot.slane %v971, 1
        %v973 = vadd.f32 %v971, %v972
        %v974 = vmul.f32 %v966, %v511
        %v975 = vmul.f32 %v973, %v511
        %v976 = vadd.f32 %v974, 1e-06
        %v977 = vadd.f32 %v975, 1e-06
        %v978 = vrsqrt.pop %v976
        %v979 = vmul.f32 %v978, %v976
        %v980 = vmul.f32 %v979, %v978
        %v981 = vmul.f32 0.5, %v980
        %v982 = vsub.f32 1.5, %v981
        %v983 = vmul.f32 %v978, %v982
        %vm984 = vweird.f32 %v976
        %vm985 = vweird.f32 %v978
        %vm986 = vmor %vm984, %vm985
        %v987 = vsel %vm986, %v978, %v983
        %v988 = vrsqrt.pop %v977
        %v989 = vmul.f32 %v988, %v977
        %v990 = vmul.f32 %v989, %v988
        %v991 = vmul.f32 0.5, %v990
        %v992 = vsub.f32 1.5, %v991
        %v993 = vmul.f32 %v988, %v992
        %vm994 = vweird.f32 %v977
        %vm995 = vweird.f32 %v988
        %vm996 = vmor %vm994, %vm995
        %v997 = vsel %vm996, %v988, %v993
        %v1000 = vrot.slane %v997, 4
        %v1001 = vsel %vm490, %v987, %v1000
        %v1003 = vmul.f32 %v952, %v1001
        %v1004 = vld [vmem:[%s10] sm:$0xff]
        %v1005 = vld [vmem:[%s11] sm:$0xff]
        %1007 = vset.pattern.permute.xlu0 0
        %1008 = vperm.xlu0 %1007, %v1004
        %v1009 = vpop.permute.xlu0 %1008
        %v1012 = vperm.slane %v1003, 0
        %v1013 = vperm.slane %v1003, 4
        %v1016 = vperm.slane %v1012, 0
        %v1017 = vperm.slane %v1013, 0
        %v1018 = vmul.f32 %v1009, %v1016
        %v1019 = vmul.f32 %v1009, %v1017
        %v1020 = vadd.f32 %v1018, 0.0
        %v1021 = vadd.f32 %v1019, 0.0
        %1022 = vset.pattern.permute.xlu0 1
        %1023 = vperm.xlu0 %1022, %v1004
        %v1024 = vpop.permute.xlu0 %1023
        %v1026 = vperm.slane %v1003, 1
        %v1027 = vperm.slane %v1003, 5
        %v1030 = vperm.slane %v1026, 1
        %v1031 = vperm.slane %v1027, 1
        %v1032 = vmul.f32 %v1024, %v1030
        %v1033 = vmul.f32 %v1024, %v1031
        %v1034 = vadd.f32 %v1020, %v1032
        %v1035 = vadd.f32 %v1021, %v1033
        %1036 = vset.pattern.permute.xlu0 2
        %1037 = vperm.xlu0 %1036, %v1004
        %v1038 = vpop.permute.xlu0 %1037
        %v1040 = vperm.slane %v1003, 2
        %v1041 = vperm.slane %v1003, 6
        %v1044 = vperm.slane %v1040, 2
        %v1045 = vperm.slane %v1041, 2
        %v1046 = vmul.f32 %v1038, %v1044
        %v1047 = vmul.f32 %v1038, %v1045
        %v1048 = vadd.f32 %v1034, %v1046
        %v1049 = vadd.f32 %v1035, %v1047
        %1050 = vset.pattern.permute.xlu0 3
        %1051 = vperm.xlu0 %1050, %v1004
        %v1052 = vpop.permute.xlu0 %1051
        %v1054 = vperm.slane %v1003, 3
        %v1055 = vperm.slane %v1003, 7
        %v1058 = vperm.slane %v1054, 3
        %v1059 = vperm.slane %v1055, 3
        %v1060 = vmul.f32 %v1052, %v1058
        %v1061 = vmul.f32 %v1052, %v1059
        %v1062 = vadd.f32 %v1048, %v1060
        %v1063 = vadd.f32 %v1049, %v1061
        %1065 = vset.pattern.permute.xlu0 0
        %1066 = vperm.xlu0 %1065, %v1005
        %v1067 = vpop.permute.xlu0 %1066
        %v1069 = vadd.f32 %v1062, %v1067
        %v1070 = vadd.f32 %v1063, %v1067
        %v1073 = vrot.slane %v1069, 4
        %v1074 = vrot.slane %v1070, 4
        %v1077 = vmul.f32 %v1069, %v1073
        %v1078 = vmul.f32 %v1070, %v1074
        %v1079 = vld [vmem:[%s12] sm:$0xf]
        %v1080 = vld [vmem:[%s13] sm:$0xf]
        %1082 = vset.pattern.permute.xlu0 0
        %1083 = vperm.xlu0 %1082, %v1079
        %v1084 = vpop.permute.xlu0 %1083
        %v1086 = vperm.slane %v1077, 0
        %v1087 = vperm.slane %v1078, 0
        %v1088 = vmul.f32 %v1084, %v1086
        %v1089 = vmul.f32 %v1084, %v1087
        %v1090 = vadd.f32 %v1088, 0.0
        %v1091 = vadd.f32 %v1089, 0.0
        %1092 = vset.pattern.permute.xlu0 1
        %1093 = vperm.xlu0 %1092, %v1079
        %v1094 = vpop.permute.xlu0 %1093
        %v1096 = vperm.slane %v1077, 1
        %v1097 = vperm.slane %v1078, 1
        %v1098 = vmul.f32 %v1094, %v1096
        %v1099 = vmul.f32 %v1094, %v1097
        %v1100 = vadd.f32 %v1090, %v1098
        %v1101 = vadd.f32 %v1091, %v1099
        %1102 = vset.pattern.permute.xlu0 2
        %1103 = vperm.xlu0 %1102, %v1079
        %v1104 = vpop.permute.xlu0 %1103
        %v1106 = vperm.slane %v1077, 2
        %v1107 = vperm.slane %v1078, 2
        %v1108 = vmul.f32 %v1104, %v1106
        %v1109 = vmul.f32 %v1104, %v1107
        %v1110 = vadd.f32 %v1100, %v1108
        %v1111 = vadd.f32 %v1101, %v1109
        %1112 = vset.pattern.permute.xlu0 3
        %1113 = vperm.xlu0 %1112, %v1079
        %v1114 = vpop.permute.xlu0 %1113
        %v1116 = vperm.slane %v1077, 3
        %v1117 = vperm.slane %v1078, 3
        %v1118 = vmul.f32 %v1114, %v1116
        %v1119 = vmul.f32 %v1114, %v1117
        %v1120 = vadd.f32 %v1110, %v1118
        %v1121 = vadd.f32 %v1111, %v1119
        %1123 = vset.pattern.permute.xlu0 0
        %1124 = vperm.xlu0 %1123, %v1080
        %v1125 = vpop.permute.xlu0 %1124
        %v1127 = vadd.f32 %v1120, %v1125
        %v1128 = vadd.f32 %v1121, %v1125
        %v1131 = vrot.slane %v1128, 4
        %v1132 = vsel %vm490, %v1127, %v1131
        %v1134 = vadd.f32 %v924, %v1132
        %1135 = vst [vmem:[%s477] sm:$0xff] %v1134
        %s1136 = sand.u32 %s336, 1
        %s1137 = scalar_lea.sflag [#allocation4], %s1136
        %s1138 = sand.u32 %s336, 1
        %s1139 = smul.addr %s1138, 8
        %s1140 = scalar_lea.vmem [#allocation5], %s1139
        // Predicated region
        $region81: #{tpu_custom_call.1} parent=75 // pred_check
          %p1141 = pneg %p346
        $region82: #{tpu_custom_call.1} parent=75 // pred_check_branch
          %1143 = sbr.rel (%p1141) target = $region84
        $region83: #{tpu_custom_call.1} parent=75 // pred_region
          %1145 = vsyncadd %s1137, 0
          %s1146 = smul.addr %s29, 2
          %s1147 = smul.addr %s1146, 4
          %s1148 = scalar_lea.hbm %s14, %s1147
          %s1150 = sshll.u32 %s1140, 4
          %s1151 = int_to_ptr.vmem [resolvable:$true] %s1150
          %s1152 = sshll.u32 %s1148, 4
          %s1153 = int_to_ptr.hbm [resolvable:$true] %s1152
          %1155 = dma.vmem_to_hbm [thread:$0]  %s1151, 128, %s1153, %s1137
        $region84: #{tpu_custom_call.1} parent=75 // pred_fallthru
          _
      $region76: #{tpu_custom_call.1} parent=5 // pred_fallthru
        _
      %p1156 = scmp.le.s32.totalorder 2, %s24
      // Predicated region
      $region85: #{tpu_custom_call.1} parent=5 // pred_check
        %p1157 = pneg %p1156
      $region86: #{tpu_custom_call.1} parent=5 // pred_check_branch
        %1159 = sbr.rel (%p1157) target = $region88
      $region87: #{tpu_custom_call.1} parent=5 // pred_region
        %s1160 = ssub.s32 %s24, 2
        // Predicated region
        $region89: #{tpu_custom_call.1} parent=87 // pred_check
          %p1161 = pneg %p352
        $region90: #{tpu_custom_call.1} parent=87 // pred_check_branch
          %1163 = sbr.rel (%p1161) target = $region92
        $region91: #{tpu_custom_call.1} parent=87 // pred_region
          %s1164 = sand.u32 %s337, 1
          %s1165 = scalar_lea.sflag [#allocation4], %s1164
          %s1166 = sand.u32 %s337, 1
          %s1167 = smul.addr %s1166, 8
          %s1168 = scalar_lea.vmem [#allocation5], %s1167
          %1170 = dma.done %s1165, 128
        $region92: #{tpu_custom_call.1} parent=87 // pred_fallthru
          _
      $region88: #{tpu_custom_call.1} parent=5 // pred_fallthru
        _
    $region6: #{tpu_custom_call.1} parent=1 // loop_footer
      %s28 = sadd.s32 1, %s24
    $region7: #{tpu_custom_call.1} parent=1 // loop_footer_branch
      %23 = sbr.rel target = $region3
    $region8: #{tpu_custom_call.1} parent=1 // loop_exit
      _
    %1171 = vsyncpa [#allocation3], 1
    %s1172 = scalar_lea.sflag [#allocation3], 1
    %1173 = vsyncpa %s1172, 1
    %1174 = vsyncpa [#allocation4], 1
    %s1175 = scalar_lea.sflag [#allocation4], 1
    %1176 = vsyncpa %s1175, 1

</llo_original>
